<compile_context>
chip_gen: v7x
topology: tpu7x:2x2x1
jax: 0.10.0
libtpu: 0.0.40
codegen_flags: <defaults>
</compile_context>

<pallas_src>
import jax
import jax.numpy as jnp
from jax.experimental import pallas as pl
from jax.experimental.pallas import tpu as pltpu


def detok_kernel(xc_ref, tprev_ref, w1t_ref, w3t_ref, w2_ref, b2_ref, b3_ref, out_ref):
    B, N, C = xc_ref.shape
    H = w1t_ref.shape[1]
    T = w2_ref.shape[1]

    # In-kernel VPU cast of activations (a handful of vregs; hides under MXU work).
    xc = xc_ref[...].astype(jnp.bfloat16)                       # (B, N, C)

    # mlp1 (no bias): (B, N, C) x (C, H) -> (B, N, H), f32 accumulation.
    x_out = jax.lax.dot_general(
        xc, w1t_ref[...], (((2,), (0,)), ((), ())),
        preferred_element_type=jnp.float32,
    )
    # mlp3: (B, N, C) x (C, H) + b3 -> (B, N, H), f32 accumulation.
    y = jax.lax.dot_general(
        xc, w3t_ref[...], (((2,), (0,)), ((), ())),
        preferred_element_type=jnp.float32,
    ) + b3_ref[...]

    # Batched x_out @ T_prev: (B, N, H) @ (B, H, T) -> (B, N, T), f32 accumulation.
    s = jnp.einsum(
        "bnh,bht->bnt",
        x_out.astype(jnp.bfloat16),
        tprev_ref[...].astype(jnp.bfloat16),
        preferred_element_type=jnp.float32,
    )

    # mlp2 amortized across all B batches: one (B*N, T) @ (T, T) matmul.
    a = jnp.dot(
        s.reshape(B * N, T).astype(jnp.bfloat16),
        w2_ref[...],
        preferred_element_type=jnp.float32,
    ) + b2_ref[...]                                             # (B*N, T) f32

    # Softmax over the T=512 axis, fully in f32 (exact reciprocal of a (16,1)
    # vector is negligible; keeps sum_t P = 1 to f32 accuracy).
    a = a - jnp.max(a, axis=-1, keepdims=True)
    e = jnp.exp(a)
    p = e / jnp.sum(e, axis=-1, keepdims=True)

    # out[b, h, t] = sum_n Y[b, n, h] * P[b, n, t]  -> (B, H, T).
    # K = N = 8 only, so keep both operands in f32 for accuracy.
    out_ref[...] = jnp.einsum(
        "bnh,bnt->bht",
        y,
        p.reshape(B, N, T),
        preferred_element_type=jnp.float32,
    ).astype(out_ref.dtype)


def prepare_detok_params(params):
    """One-time weight preparation (do this at param-init time, not per call)."""
    T = params["w2"].shape[0]
    H = params["w3"].shape[0]
    return {
        "w1t": jnp.asarray(params["w1"].T, dtype=jnp.bfloat16),   # (C, H)
        "w3t": jnp.asarray(params["w3"].T, dtype=jnp.bfloat16),   # (C, H)
        "w2t": jnp.asarray(params["w2"].T, dtype=jnp.bfloat16),   # (T, T)
        "b2": jnp.asarray(params["b2"], dtype=jnp.float32).reshape(1, T),
        "b3": jnp.asarray(params["b3"], dtype=jnp.float32).reshape(1, H),
    }


def detokenization_forward(Xc, T_prev, prepared, *, out_dtype=jnp.float32):
    """Xc: (B, N, C) f32, T_prev: (B, H, T) f32, prepared = prepare_detok_params(...)."""
    B, N, C = Xc.shape
    _, H, T = T_prev.shape

    # Single fused grid step on all generations: at these shapes the kernel is
    # launch/DMA-latency bound; splitting across TensorCores (v7x) would only
    # duplicate the W2 DMA and per-step overhead.
    return pl.pallas_call(
        detok_kernel,
        out_shape=jax.ShapeDtypeStruct((B, H, T), out_dtype),
        grid=(1,),
        in_specs=[
            pl.BlockSpec((B, N, C), lambda i: (0, 0, 0)),   # Xc (f32, cast in-kernel)
            pl.BlockSpec((B, H, T), lambda i: (0, 0, 0)),   # T_prev (f32, cast in-kernel)
            pl.BlockSpec((C, H), lambda i: (0, 0)),         # W1^T (bf16, pre-cast)
            pl.BlockSpec((C, H), lambda i: (0, 0)),         # W3^T (bf16, pre-cast)
            pl.BlockSpec((T, T), lambda i: (0, 0)),         # W2^T (bf16, pre-cast)
            pl.BlockSpec((1, T), lambda i: (0, 0)),         # b2 (f32)
            pl.BlockSpec((1, H), lambda i: (0, 0)),         # b3 (f32)
        ],
        out_specs=pl.BlockSpec((B, H, T), lambda i: (0, 0, 0)),
        compiler_params=pltpu.CompilerParams(dimension_semantics=("arbitrary",)),
    )(Xc, T_prev, prepared["w1t"], prepared["w3t"], prepared["w2t"],
      prepared["b2"], prepared["b3"])


def reference_forward(Xc, T_prev, params):
    x_out = Xc @ params["w1"].T
    a = jnp.einsum("bnh,bht->bnt", x_out, T_prev) @ params["w2"].T + params["b2"]
    p = jax.nn.softmax(a, axis=-1)
    y = Xc @ params["w3"].T + params["b3"]
    return jnp.einsum("bnh,bnt->bht", y, p)


if __name__ == "__main__":
    # Small shapes consistent with the module (mlp2 hard-codes 512).
    B, N = 2, 8
    C = 16          # input_channel_dim
    H = 32          # hidden_dim
    T = 512         # fixed by nn.Linear(512, 512)

    key = jax.random.PRNGKey(0)
    k_xc, k_tp, k_w1, k_w2, k_b2, k_w3, k_b3 = jax.random.split(key, 7)

    Xc = jax.random.normal(k_xc, (B, N, C), dtype=jnp.float32)
    T_prev = jax.random.normal(k_tp, (B, H, T), dtype=jnp.float32) * 0.05

    # PyTorch Linear convention: weight is (out_features, in_features).
    params = {
        "w1": jax.random.normal(k_w1, (H, C), dtype=jnp.float32) * 0.1,   # mlp1, no bias
        "w2": jax.random.normal(k_w2, (T, T), dtype=jnp.float32) * 0.05,  # mlp2
        "b2": jax.random.normal(k_b2, (T,), dtype=jnp.float32) * 0.1,
        "w3": jax.random.normal(k_w3, (H, C), dtype=jnp.float32) * 0.1,   # mlp3
        "b3": jax.random.normal(k_b3, (H,), dtype=jnp.float32) * 0.1,
    }

    # One-time weight prep (cached across forward calls).
    prepared = jax.block_until_ready(prepare_detok_params(params))

    out = detokenization_forward(Xc, T_prev, prepared)
    out = jax.block_until_ready(out)

    ref = reference_forward(Xc, T_prev, params)
    assert out.shape == (B, H, T), out.shape
    # bf16 MXU operands (f32 accumulation) upstream of the softmax; final einsum
    # and softmax are f32, so the tolerance is tighter than the previous version.
    assert jnp.allclose(out, ref, atol=2e-3, rtol=2e-2), "mismatch vs. reference"

    print("KERNEL_OK")
</pallas_src>

<mosaic_0001>
module attributes {stable_mosaic.version = 11 : i64} {
  func.func @detok_kernel(%arg0: i32, %arg1: memref<2x8x16xf32, #tpu.memory_space<vmem>>, %arg2: memref<2x32x512xf32, #tpu.memory_space<vmem>>, %arg3: memref<16x32xbf16, #tpu.memory_space<vmem>>, %arg4: memref<16x32xbf16, #tpu.memory_space<vmem>>, %arg5: memref<512x512xbf16, #tpu.memory_space<vmem>>, %arg6: memref<1x512xf32, #tpu.memory_space<vmem>>, %arg7: memref<1x32xf32, #tpu.memory_space<vmem>>, %arg8: memref<2x32x512xf32, #tpu.memory_space<vmem>>) attributes {dimension_semantics = [#tpu.dimension_semantics<arbitrary>], iteration_bounds = array<i64: 1>, scalar_prefetch = 0 : i64, scratch_operands = 0 : i64, tpu.core_type = #tpu.core_type<tc>, window_params = [{pipeline_mode = #tpu.pipeline_mode<synchronous>, transform_indices = @transform_0, window_bounds = array<i64: 2, 8, 16>}, {pipeline_mode = #tpu.pipeline_mode<synchronous>, transform_indices = @transform_1, window_bounds = array<i64: 2, 32, 512>}, {pipeline_mode = #tpu.pipeline_mode<synchronous>, transform_indices = @transform_2, window_bounds = array<i64: 16, 32>}, {pipeline_mode = #tpu.pipeline_mode<synchronous>, transform_indices = @transform_3, window_bounds = array<i64: 16, 32>}, {pipeline_mode = #tpu.pipeline_mode<synchronous>, transform_indices = @transform_4, window_bounds = array<i64: 512, 512>}, {pipeline_mode = #tpu.pipeline_mode<synchronous>, transform_indices = @transform_5, window_bounds = array<i64: 1, 512>}, {pipeline_mode = #tpu.pipeline_mode<synchronous>, transform_indices = @transform_6, window_bounds = array<i64: 1, 32>}, {pipeline_mode = #tpu.pipeline_mode<synchronous>, transform_indices = @transform_7, window_bounds = array<i64: 2, 32, 512>}]} {
    %c0 = arith.constant 0 : index
    %c0_0 = arith.constant 0 : index
    %c0_1 = arith.constant 0 : index
    %0 = vector.load %arg1[%c0, %c0_0, %c0_1] : memref<2x8x16xf32, #tpu.memory_space<vmem>>, vector<2x8x16xf32>
    %1 = arith.truncf %0 : vector<2x8x16xf32> to vector<2x8x16xbf16>
    %c0_2 = arith.constant 0 : index
    %c0_3 = arith.constant 0 : index
    %2 = vector.load %arg3[%c0_2, %c0_3] : memref<16x32xbf16, #tpu.memory_space<vmem>>, vector<16x32xbf16>
    %cst = arith.constant dense<0.000000e+00> : vector<2x8x32xf32>
    %3 = tpu.matmul %1, %2, %cst {dimension_numbers = #tpu.dot_dimension_numbers<[2], [0], [0, 1], [1], [0, 0, 0, 1, 1, 1], [], []>} : vector<2x8x16xbf16>, vector<16x32xbf16>, vector<2x8x32xf32> -> vector<2x8x32xf32>
    %c0_4 = arith.constant 0 : index
    %c0_5 = arith.constant 0 : index
    %4 = vector.load %arg4[%c0_4, %c0_5] : memref<16x32xbf16, #tpu.memory_space<vmem>>, vector<16x32xbf16>
    %cst_6 = arith.constant dense<0.000000e+00> : vector<2x8x32xf32>
    %5 = tpu.matmul %1, %4, %cst_6 {dimension_numbers = #tpu.dot_dimension_numbers<[2], [0], [0, 1], [1], [0, 0, 0, 1, 1, 1], [], []>} : vector<2x8x16xbf16>, vector<16x32xbf16>, vector<2x8x32xf32> -> vector<2x8x32xf32>
    %c0_7 = arith.constant 0 : index
    %c0_8 = arith.constant 0 : index
    %6 = vector.load %arg7[%c0_7, %c0_8] : memref<1x32xf32, #tpu.memory_space<vmem>>, vector<1x32xf32>
    %7 = vector.shape_cast %6 : vector<1x32xf32> to vector<1x1x32xf32>
    %8 = vector.broadcast %7 : vector<1x1x32xf32> to vector<2x8x32xf32>
    %9 = arith.addf %5, %8 : vector<2x8x32xf32>
    %10 = arith.truncf %3 : vector<2x8x32xf32> to vector<2x8x32xbf16>
    %c0_9 = arith.constant 0 : index
    %c0_10 = arith.constant 0 : index
    %c0_11 = arith.constant 0 : index
    %11 = vector.load %arg2[%c0_9, %c0_10, %c0_11] : memref<2x32x512xf32, #tpu.memory_space<vmem>>, vector<2x32x512xf32>
    %12 = arith.truncf %11 : vector<2x32x512xf32> to vector<2x32x512xbf16>
    "tpu.trace_start"() <{level = 10 : i32, message = "bnh,bht->bnt"}> : () -> ()
    %cst_12 = arith.constant dense<0.000000e+00> : vector<2x8x512xf32>
    %13 = tpu.matmul %10, %12, %cst_12 {dimension_numbers = #tpu.dot_dimension_numbers<[2], [1], [1], [2], [0, 0, 0, 1, 1, 2], [0], [0]>} : vector<2x8x32xbf16>, vector<2x32x512xbf16>, vector<2x8x512xf32> -> vector<2x8x512xf32>
    "tpu.trace_stop"() : () -> ()
    %14 = vector.shape_cast %13 : vector<2x8x512xf32> to vector<16x512xf32>
    %15 = arith.truncf %14 : vector<16x512xf32> to vector<16x512xbf16>
    %c0_13 = arith.constant 0 : index
    %c0_14 = arith.constant 0 : index
    %16 = vector.load %arg5[%c0_13, %c0_14] : memref<512x512xbf16, #tpu.memory_space<vmem>>, vector<512x512xbf16>
    %cst_15 = arith.constant dense<0.000000e+00> : vector<16x512xf32>
    %17 = tpu.matmul %15, %16, %cst_15 {dimension_numbers = #tpu.dot_dimension_numbers<[1], [0], [0], [1], [0, 0, 1, 1], [], []>} : vector<16x512xbf16>, vector<512x512xbf16>, vector<16x512xf32> -> vector<16x512xf32>
    %c0_16 = arith.constant 0 : index
    %c0_17 = arith.constant 0 : index
    %18 = vector.load %arg6[%c0_16, %c0_17] : memref<1x512xf32, #tpu.memory_space<vmem>>, vector<1x512xf32>
    %19 = vector.broadcast %18 : vector<1x512xf32> to vector<16x512xf32>
    %20 = arith.addf %17, %19 : vector<16x512xf32>
    %cst_18 = arith.constant dense<0xFF800000> : vector<16xf32>
    %21 = vector.multi_reduction <maximumf>, %20, %cst_18 [1] : vector<16x512xf32> to vector<16xf32>
    %22 = vector.shape_cast %21 : vector<16xf32> to vector<16x1xf32>
    %23 = vector.broadcast %22 : vector<16x1xf32> to vector<16x512xf32>
    %24 = arith.subf %20, %23 : vector<16x512xf32>
    %25 = math.exp %24 : vector<16x512xf32>
    %cst_19 = arith.constant dense<0.000000e+00> : vector<16xf32>
    %26 = vector.multi_reduction <add>, %25, %cst_19 [1] : vector<16x512xf32> to vector<16xf32>
    %27 = vector.shape_cast %26 : vector<16xf32> to vector<16x1xf32>
    %28 = vector.broadcast %27 : vector<16x1xf32> to vector<16x512xf32>
    %29 = arith.divf %25, %28 : vector<16x512xf32>
    %30 = vector.shape_cast %29 : vector<16x512xf32> to vector<2x8x512xf32>
    "tpu.trace_start"() <{level = 10 : i32, message = "bnh,bnt->bht"}> : () -> ()
    %cst_20 = arith.constant dense<0.000000e+00> : vector<2x32x512xf32>
    %31 = tpu.matmul %9, %30, %cst_20 {dimension_numbers = #tpu.dot_dimension_numbers<[1], [1], [2], [2], [0, 0, 0, 2, 1, 2], [0], [0]>} : vector<2x8x32xf32>, vector<2x8x512xf32>, vector<2x32x512xf32> -> vector<2x32x512xf32>
    "tpu.trace_stop"() : () -> ()
    %c0_21 = arith.constant 0 : index
    %c0_22 = arith.constant 0 : index
    %c0_23 = arith.constant 0 : index
    %32 = vector.load %arg8[%c0_21, %c0_22, %c0_23] : memref<2x32x512xf32, #tpu.memory_space<vmem>>, vector<2x32x512xf32>
    tpu.vector_store %arg8[%c0_21, %c0_22, %c0_23], %31 {strides = array<i32>} : memref<2x32x512xf32, #tpu.memory_space<vmem>>, vector<2x32x512xf32>,
    return
  }
  func.func @transform_0(%arg0: i32) -> (i32, i32, i32) {
    %c0_i32 = arith.constant 0 : i32
    %c0_i32_0 = arith.constant 0 : i32
    %c0_i32_1 = arith.constant 0 : i32
    %c0_i32_2 = arith.constant 0 : i32
    return %c0_i32, %c0_i32_0, %c0_i32_1 : i32, i32, i32
  }
  func.func @transform_1(%arg0: i32) -> (i32, i32, i32) {
    %c0_i32 = arith.constant 0 : i32
    %c0_i32_0 = arith.constant 0 : i32
    %c0_i32_1 = arith.constant 0 : i32
    %c0_i32_2 = arith.constant 0 : i32
    return %c0_i32, %c0_i32_0, %c0_i32_1 : i32, i32, i32
  }
  func.func @transform_2(%arg0: i32) -> (i32, i32) {
    %c0_i32 = arith.constant 0 : i32
    %c0_i32_0 = arith.constant 0 : i32
    %c0_i32_1 = arith.constant 0 : i32
    return %c0_i32, %c0_i32_0 : i32, i32
  }
  func.func @transform_3(%arg0: i32) -> (i32, i32) {
    %c0_i32 = arith.constant 0 : i32
    %c0_i32_0 = arith.constant 0 : i32
    %c0_i32_1 = arith.constant 0 : i32
    return %c0_i32, %c0_i32_0 : i32, i32
  }
  func.func @transform_4(%arg0: i32) -> (i32, i32) {
    %c0_i32 = arith.constant 0 : i32
    %c0_i32_0 = arith.constant 0 : i32
    %c0_i32_1 = arith.constant 0 : i32
    return %c0_i32, %c0_i32_0 : i32, i32
  }
  func.func @transform_5(%arg0: i32) -> (i32, i32) {
    %c0_i32 = arith.constant 0 : i32
    %c0_i32_0 = arith.constant 0 : i32
    %c0_i32_1 = arith.constant 0 : i32
    return %c0_i32, %c0_i32_0 : i32, i32
  }
  func.func @transform_6(%arg0: i32) -> (i32, i32) {
    %c0_i32 = arith.constant 0 : i32
    %c0_i32_0 = arith.constant 0 : i32
    %c0_i32_1 = arith.constant 0 : i32
    return %c0_i32, %c0_i32_0 : i32, i32
  }
  func.func @transform_7(%arg0: i32) -> (i32, i32, i32) {
    %c0_i32 = arith.constant 0 : i32
    %c0_i32_0 = arith.constant 0 : i32
    %c0_i32_1 = arith.constant 0 : i32
    %c0_i32_2 = arith.constant 0 : i32
    return %c0_i32, %c0_i32_0, %c0_i32_1 : i32, i32, i32
  }
}

</mosaic_0001>

<llo_original>
// kernel: tpu_custom_call.1
$region0: #{tpu_custom_call.1}
  #allocation0 [shape = 'u32[]', space=smem, size = 0x4, offset = 0x4, fixed_abs, tag = 'smem constant byte address 0x4 - core index']
  #allocation1 [shape = 'u32[144,128]{1,0:T(1,128)}', space=vmem, size = 0x12000, scoped, tag = 'internal scratch']
  %s0 = inlined_call_operand.hbm [shape: f32[2,8,16], index: 0, kind: input, shape index: {}]
  %s1 = inlined_call_operand.hbm [shape: f32[2,32,512], index: 1, kind: input, shape index: {}]
  %s2 = inlined_call_operand.hbm [shape: bf16[16,32], index: 2, kind: input, shape index: {}]
  %s3 = inlined_call_operand.vmem [shape: bf16[16,32], index: 3, kind: input, shape index: {}]
  %s4 = inlined_call_operand.hbm [shape: bf16[512,512], index: 4, kind: input, shape index: {}]
  %s5 = inlined_call_operand.vmem [shape: f32[1,512], index: 5, kind: input, shape index: {}]
  %s6 = inlined_call_operand.vmem [shape: f32[1,32], index: 6, kind: input, shape index: {}]
  %s7 = inlined_call_operand.hbm [shape: f32[2,32,512], index: 7, kind: output, shape index: {}]
  %s8 = sld [smem:[#allocation0]]
  $region54: #{tpu_custom_call.1} parent=0
    _
  %s10 = ssub.s32 1, %s8
  %s11 = scalar_select 0, %s10, %s8
  $region1: #{tpu_custom_call.1} parent=0
    #allocation2 [shape = 'u8[8192]{0}', space=vmem, size = 0x2000, scoped, tag = 'input window, operand 0, single buffered']
    #allocation3 [shape = 's32[1]{0}', space=sflag, size = 0x4, scoped, tag = 'scoped memory for tpu_custom_call.1']
    #allocation4 [shape = 's32[1]{0}', space=sflag, size = 0x4, scoped, tag = 'scoped memory for tpu_custom_call.1']
    #allocation5 [shape = 'u8[131072]{0}', space=vmem, size = 0x20000, scoped, tag = 'input window, operand 1, single buffered']
    #allocation6 [shape = 's32[1]{0}', space=sflag, size = 0x4, scoped, tag = 'scoped memory for tpu_custom_call.1']
    #allocation7 [shape = 'u8[4096]{0}', space=vmem, size = 0x1000, scoped, tag = 'input window, operand 2, single buffered']
    #allocation8 [shape = 'u8[524288]{0}', space=vmem, size = 0x80000, scoped, tag = 'input window, operand 4, single buffered']
    #allocation9 [shape = 's32[1]{0}', space=sflag, size = 0x4, scoped, tag = 'scoped memory for tpu_custom_call.1']
    #allocation10 [shape = 'u8[131072]{0}', space=vmem, size = 0x20000, scoped, tag = 'output window, operand 0, single buffered']
    %12 = vsyncpa [#allocation3], 0
    %13 = vsyncpa [#allocation6], 0
    %14 = vsyncpa [#allocation9], 0
    %15 = vsyncpa [#allocation4], 0
    // Predicated region
    $region2: #{tpu_custom_call.1} parent=1 // pred_check
      _
    $region3: #{tpu_custom_call.1} parent=1 // pred_check_branch
      %17 = sbr.rel (0) target = $region5
    $region4: #{tpu_custom_call.1} parent=1 // pred_region
      %s19 = ssub.s32 256, 256
      %20 = vsyncadd [#allocation3], %s19
      %s21 = sshll.u32 [#allocation2], 4
      %s22 = int_to_ptr.vmem [resolvable:$true] %s21
      %27 = dma.hbm_to_vmem [thread:$0]  %s0, 256, %s22, [#allocation3], 128, 128, 8
    $region5: #{tpu_custom_call.1} parent=1 // pred_fallthru
      _
    // Predicated region
    $region6: #{tpu_custom_call.1} parent=1 // pred_check
      _
    $region7: #{tpu_custom_call.1} parent=1 // pred_check_branch
      %29 = sbr.rel (0) target = $region9
    $region8: #{tpu_custom_call.1} parent=1 // pred_region
      %s31 = ssub.s32 4096, 4096
      %32 = vsyncadd [#allocation6], %s31
      %s33 = sshll.u32 [#allocation5], 4
      %s34 = int_to_ptr.vmem [resolvable:$true] %s33
      %39 = dma.hbm_to_vmem [thread:$0]  %s1, 4096, %s34, [#allocation6], 512, 512, 32
    $region9: #{tpu_custom_call.1} parent=1 // pred_fallthru
      _
    // Predicated region
    $region10: #{tpu_custom_call.1} parent=1 // pred_check
      _
    $region11: #{tpu_custom_call.1} parent=1 // pred_check_branch
      %41 = sbr.rel (0) target = $region13
    $region12: #{tpu_custom_call.1} parent=1 // pred_region
      %s43 = ssub.s32 128, 128
      %44 = vsyncadd [#allocation6], %s43
      %s45 = sshll.u32 [#allocation7], 4
      %s46 = int_to_ptr.vmem [resolvable:$true] %s45
      %51 = dma.hbm_to_vmem [thread:$0]  %s2, 128, %s46, [#allocation6], 64, 64, 4
    $region13: #{tpu_custom_call.1} parent=1 // pred_fallthru
      _
    // Predicated region
    $region14: #{tpu_custom_call.1} parent=1 // pred_check
      _
    $region15: #{tpu_custom_call.1} parent=1 // pred_check_branch
      %53 = sbr.rel (0) target = $region17
    $region16: #{tpu_custom_call.1} parent=1 // pred_region
      _
    $region17: #{tpu_custom_call.1} parent=1 // pred_fallthru
      _
    // Predicated region
    $region18: #{tpu_custom_call.1} parent=1 // pred_check
      _
    $region19: #{tpu_custom_call.1} parent=1 // pred_check_branch
      %55 = sbr.rel (0) target = $region21
    $region20: #{tpu_custom_call.1} parent=1 // pred_region
      %s57 = ssub.s32 16384, 16384
      %58 = vsyncadd [#allocation9], %s57
      %s59 = sshll.u32 [#allocation8], 4
      %s60 = int_to_ptr.vmem [resolvable:$true] %s59
      %65 = dma.hbm_to_vmem [thread:$0]  %s4, 16384, %s60, [#allocation9], 256, 256, 16
    $region21: #{tpu_custom_call.1} parent=1 // pred_fallthru
      _
    // Predicated region
    $region22: #{tpu_custom_call.1} parent=1 // pred_check
      _
    $region23: #{tpu_custom_call.1} parent=1 // pred_check_branch
      %67 = sbr.rel (0) target = $region25
    $region24: #{tpu_custom_call.1} parent=1 // pred_region
      _
    $region25: #{tpu_custom_call.1} parent=1 // pred_fallthru
      _
    // Predicated region
    $region26: #{tpu_custom_call.1} parent=1 // pred_check
      _
    $region27: #{tpu_custom_call.1} parent=1 // pred_check_branch
      %69 = sbr.rel (0) target = $region29
    $region28: #{tpu_custom_call.1} parent=1 // pred_region
      _
    $region29: #{tpu_custom_call.1} parent=1 // pred_fallthru
      _
    // Predicated region
    $region30: #{tpu_custom_call.1} parent=1 // pred_check
      _
    $region31: #{tpu_custom_call.1} parent=1 // pred_check_branch
      %71 = sbr.rel (0) target = $region33
    $region32: #{tpu_custom_call.1} parent=1 // pred_region
      %72 = dma.done [#allocation3], 256
    $region33: #{tpu_custom_call.1} parent=1 // pred_fallthru
      _
    // Predicated region
    $region34: #{tpu_custom_call.1} parent=1 // pred_check
      _
    $region35: #{tpu_custom_call.1} parent=1 // pred_check_branch
      %74 = sbr.rel (0) target = $region37
    $region36: #{tpu_custom_call.1} parent=1 // pred_region
      %75 = dma.done [#allocation6], 4096
    $region37: #{tpu_custom_call.1} parent=1 // pred_fallthru
      _
    // Predicated region
    $region38: #{tpu_custom_call.1} parent=1 // pred_check
      _
    $region39: #{tpu_custom_call.1} parent=1 // pred_check_branch
      %77 = sbr.rel (0) target = $region41
    $region40: #{tpu_custom_call.1} parent=1 // pred_region
      %78 = dma.done [#allocation6], 128
    $region41: #{tpu_custom_call.1} parent=1 // pred_fallthru
      _
    // Predicated region
    $region42: #{tpu_custom_call.1} parent=1 // pred_check
      _
    $region43: #{tpu_custom_call.1} parent=1 // pred_check_branch
      %80 = sbr.rel (0) target = $region45
    $region44: #{tpu_custom_call.1} parent=1 // pred_region
      %81 = dma.done [#allocation9], 16384
    $region45: #{tpu_custom_call.1} parent=1 // pred_fallthru
      _
    %v83 = vld [vmem:[#allocation2] sm:$0xff]
    %v84 = vld [vmem:[#allocation2 + $0x8] sm:$0xff]
    %v85 = vpack.c.bf16 %v83, %v83
    %v86 = vpack.c.bf16 %v84, %v84
    %v87 = vld [vmem:[#allocation7] sm:$0xf]
    %v88 = vld [vmem:[#allocation7 + $0x4] sm:$0xf]
    %v91 = vunpack.c.l.b16 %v85
    %v92 = vunpack.c.l.b16 %v86
    %v93 = vpack.c.b16 %v92, %v91
    %v96 = vunpack.c.l.b16 %v87
    %v97 = vunpack.c.l.b16 %v88
    %v98 = vpack.c.b16 %v97, %v96
    %vm100 = vcmask 130048
    %v102 = vsel %vm100, %v93, 0
    %104 = vmatprep.subr.bf16.mxu0 0
    %105 = vmatpush1.bf16.msra.mxu0 %v98
    %106 = vmatprep.subr.bf16.mxu0 0
    %107 = vmatpush1.bf16.msra.mxu0 0
    %108 = vmatprep.subr.bf16.mxu0 0
    %109 = vmatpush1.bf16.msra.mxu0 0
    %110 = vmatprep.subr.bf16.mxu0 0
    %111 = vmatpush1.bf16.msra.mxu0 0
    %112 = vmatprep.subr.bf16.mxu0 0
    %113 = vmatpush1.bf16.msra.mxu0 0
    %114 = vmatprep.subr.bf16.mxu0 0
    %115 = vmatpush1.bf16.msra.mxu0 0
    %116 = vmatprep.subr.bf16.mxu0 0
    %117 = vmatpush1.bf16.msra.mxu0 0
    %118 = vmatprep.subr.bf16.mxu0 0
    %119 = vmatpush1.bf16.msra.mxu0 0
    %120 = vmatprep.subr.bf16.mxu0 0
    %121 = vmatpush1.bf16.msra.mxu0 0
    %122 = vmatprep.subr.bf16.mxu0 0
    %123 = vmatpush1.bf16.msra.mxu0 0
    %124 = vmatprep.subr.bf16.mxu0 0
    %125 = vmatpush1.bf16.msra.mxu0 0
    %126 = vmatprep.subr.bf16.mxu0 0
    %127 = vmatpush1.bf16.msra.mxu0 0
    %128 = vmatprep.subr.bf16.mxu0 0
    %129 = vmatpush1.bf16.msra.mxu0 0
    %130 = vmatprep.subr.bf16.mxu0 0
    %131 = vmatpush1.bf16.msra.mxu0 0
    %132 = vmatprep.subr.bf16.mxu0 0
    %133 = vmatpush1.bf16.msra.mxu0 0
    %134 = vmatprep.subr.bf16.mxu0 0
    %135 = vmatpush1.bf16.msra.mxu0 0
    %136 = vmatprep.mubr.bf16.mxu0 0
    %137 = vmatmul.mubr.bf16.gmra.mrb[0].mxu0 %v102
    %v138 = vpop.f32.mrb[0].mxu0
    %v139 = vadd.f32 0.0, %v138
    %v140 = vpop.f32.mrb[0].mxu0
    %v141 = vpop.f32.mrb[0].mxu0
    %v142 = vadd.f32 0.0, %v141
    %v143 = vpop.f32.mrb[0].mxu0
    %144 = vdwg.mxu0
    %v145 = vld [vmem:[%s3] sm:$0xf]
    %v146 = vld [vmem:[%s3 + $0x4] sm:$0xf]
    %v147 = vld [vmem:[%s6] sm:$0x1]
    %v149 = vlaneseq
    %v150 = vshrl.u32 %v149, 7
    %v151 = vsub.s32 0, %v150
    %v152 = vrot.slane %v147, %v151
    %v156 = vunpack.c.l.b16 %v145
    %v157 = vunpack.c.l.b16 %v146
    %v158 = vpack.c.b16 %v157, %v156
    %160 = vmatprep.subr.bf16.mxu0 0
    %161 = vmatpush1.bf16.msra.mxu0 %v158
    %162 = vmatprep.subr.bf16.mxu0 0
    %163 = vmatpush1.bf16.msra.mxu0 0
    %164 = vmatprep.subr.bf16.mxu0 0
    %165 = vmatpush1.bf16.msra.mxu0 0
    %166 = vmatprep.subr.bf16.mxu0 0
    %167 = vmatpush1.bf16.msra.mxu0 0
    %168 = vmatprep.subr.bf16.mxu0 0
    %169 = vmatpush1.bf16.msra.mxu0 0
    %170 = vmatprep.subr.bf16.mxu0 0
    %171 = vmatpush1.bf16.msra.mxu0 0
    %172 = vmatprep.subr.bf16.mxu0 0
    %173 = vmatpush1.bf16.msra.mxu0 0
    %174 = vmatprep.subr.bf16.mxu0 0
    %175 = vmatpush1.bf16.msra.mxu0 0
    %176 = vmatprep.subr.bf16.mxu0 0
    %177 = vmatpush1.bf16.msra.mxu0 0
    %178 = vmatprep.subr.bf16.mxu0 0
    %179 = vmatpush1.bf16.msra.mxu0 0
    %180 = vmatprep.subr.bf16.mxu0 0
    %181 = vmatpush1.bf16.msra.mxu0 0
    %182 = vmatprep.subr.bf16.mxu0 0
    %183 = vmatpush1.bf16.msra.mxu0 0
    %184 = vmatprep.subr.bf16.mxu0 0
    %185 = vmatpush1.bf16.msra.mxu0 0
    %186 = vmatprep.subr.bf16.mxu0 0
    %187 = vmatpush1.bf16.msra.mxu0 0
    %188 = vmatprep.subr.bf16.mxu0 0
    %189 = vmatpush1.bf16.msra.mxu0 0
    %190 = vmatprep.subr.bf16.mxu0 0
    %191 = vmatpush1.bf16.msra.mxu0 0
    %192 = vmatprep.mubr.bf16.mxu0 0
    %193 = vmatmul.mubr.bf16.gmra.mrb[0].mxu0 %v102
    %v194 = vpop.f32.mrb[0].mxu0
    %v195 = vadd.f32 %v152, %v194
    %v196 = vpop.f32.mrb[0].mxu0
    %v197 = vpop.f32.mrb[0].mxu0
    %v198 = vadd.f32 %v152, %v197
    %v199 = vpop.f32.mrb[0].mxu0
    %200 = vdwg.mxu0
    %v201 = vpack.c.bf16 %v139, %v139
    %v202 = vpack.c.bf16 %v142, %v142
    %v203 = vld [vmem:[#allocation5] sm:$0xff]
    %v204 = vld [vmem:[#allocation5 + $0x8] sm:$0xff]
    %v205 = vld [vmem:[#allocation5 + $0x10] sm:$0xff]
    %v206 = vld [vmem:[#allocation5 + $0x18] sm:$0xff]
    %v207 = vld [vmem:[#allocation5 + $0x20] sm:$0xff]
    %v208 = vld [vmem:[#allocation5 + $0x28] sm:$0xff]
    %v209 = vld [vmem:[#allocation5 + $0x30] sm:$0xff]
    %v210 = vld [vmem:[#allocation5 + $0x38] sm:$0xff]
    %v211 = vld [vmem:[#allocation5 + $0x40] sm:$0xff]
    %v212 = vld [vmem:[#allocation5 + $0x48] sm:$0xff]
    %v213 = vld [vmem:[#allocation5 + $0x50] sm:$0xff]
    %v214 = vld [vmem:[#allocation5 + $0x58] sm:$0xff]
    %v215 = vld [vmem:[#allocation5 + $0x60] sm:$0xff]
    %v216 = vld [vmem:[#allocation5 + $0x68] sm:$0xff]
    %v217 = vld [vmem:[#allocation5 + $0x70] sm:$0xff]
    %v218 = vld [vmem:[#allocation5 + $0x78] sm:$0xff]
    %v219 = vld [vmem:[#allocation5 + $0x80] sm:$0xff]
    %v220 = vld [vmem:[#allocation5 + $0x88] sm:$0xff]
    %v221 = vld [vmem:[#allocation5 + $0x90] sm:$0xff]
    %v222 = vld [vmem:[#allocation5 + $0x98] sm:$0xff]
    %v223 = vld [vmem:[#allocation5 + $0xa0] sm:$0xff]
    %v224 = vld [vmem:[#allocation5 + $0xa8] sm:$0xff]
    %v225 = vld [vmem:[#allocation5 + $0xb0] sm:$0xff]
    %v226 = vld [vmem:[#allocation5 + $0xb8] sm:$0xff]
    %v227 = vld [vmem:[#allocation5 + $0xc0] sm:$0xff]
    %v228 = vld [vmem:[#allocation5 + $0xc8] sm:$0xff]
    %v229 = vld [vmem:[#allocation5 + $0xd0] sm:$0xff]
    %v230 = vld [vmem:[#allocation5 + $0xd8] sm:$0xff]
    %v231 = vld [vmem:[#allocation5 + $0xe0] sm:$0xff]
    %v232 = vld [vmem:[#allocation5 + $0xe8] sm:$0xff]
    %v233 = vld [vmem:[#allocation5 + $0xf0] sm:$0xff]
    %v234 = vld [vmem:[#allocation5 + $0xf8] sm:$0xff]
    %v235 = vpack.c.bf16 %v207, %v203
    %v236 = vpack.c.bf16 %v208, %v204
    %v237 = vpack.c.bf16 %v209, %v205
    %v238 = vpack.c.bf16 %v210, %v206
    %v239 = vpack.c.bf16 %v215, %v211
    %v240 = vpack.c.bf16 %v216, %v212
    %v241 = vpack.c.bf16 %v217, %v213
    %v242 = vpack.c.bf16 %v218, %v214
    %v243 = vpack.c.bf16 %v223, %v219
    %v244 = vpack.c.bf16 %v224, %v220
    %v245 = vpack.c.bf16 %v225, %v221
    %v246 = vpack.c.bf16 %v226, %v222
    %v247 = vpack.c.bf16 %v231, %v227
    %v248 = vpack.c.bf16 %v232, %v228
    %v249 = vpack.c.bf16 %v233, %v229
    %v250 = vpack.c.bf16 %v234, %v230
    %vm251 = vcmask 261120
    %v253 = vsel %vm251, %v201, 0
    %255 = vmatprep.subr.bf16.mxu0 %v236
    %256 = vmatpush1.bf16.msra.mxu0 %v235
    %257 = vmatprep.subr.bf16.mxu0 %v240
    %258 = vmatpush1.bf16.msra.mxu0 %v239
    %259 = vmatprep.subr.bf16.mxu0 0
    %260 = vmatpush1.bf16.msra.mxu0 0
    %261 = vmatprep.subr.bf16.mxu0 0
    %262 = vmatpush1.bf16.msra.mxu0 0
    %263 = vmatprep.subr.bf16.mxu0 0
    %264 = vmatpush1.bf16.msra.mxu0 0
    %265 = vmatprep.subr.bf16.mxu0 0
    %266 = vmatpush1.bf16.msra.mxu0 0
    %267 = vmatprep.subr.bf16.mxu0 0
    %268 = vmatpush1.bf16.msra.mxu0 0
    %269 = vmatprep.subr.bf16.mxu0 0
    %270 = vmatpush1.bf16.msra.mxu0 0
    %271 = vmatprep.subr.bf16.mxu0 0
    %272 = vmatpush1.bf16.msra.mxu0 0
    %273 = vmatprep.subr.bf16.mxu0 0
    %274 = vmatpush1.bf16.msra.mxu0 0
    %275 = vmatprep.subr.bf16.mxu0 0
    %276 = vmatpush1.bf16.msra.mxu0 0
    %277 = vmatprep.subr.bf16.mxu0 0
    %278 = vmatpush1.bf16.msra.mxu0 0
    %279 = vmatprep.subr.bf16.mxu0 0
    %280 = vmatpush1.bf16.msra.mxu0 0
    %281 = vmatprep.subr.bf16.mxu0 0
    %282 = vmatpush1.bf16.msra.mxu0 0
    %283 = vmatprep.subr.bf16.mxu0 0
    %284 = vmatpush1.bf16.msra.mxu0 0
    %285 = vmatprep.subr.bf16.mxu0 0
    %286 = vmatpush1.bf16.msra.mxu0 0
    %287 = vmatprep.mubr.bf16.mxu0 0
    %288 = vmatmul.mubr.bf16.gmra.mrb[0].mxu0 %v253
    %v289 = vpop.f32.mrb[0].mxu0
    %v290 = vadd.f32 0.0, %v289
    %v291 = vpop.f32.mrb[0].mxu0
    %v292 = vadd.f32 0.0, %v291
    %v293 = vpop.f32.mrb[0].mxu0
    %v294 = vpop.f32.mrb[0].mxu0
    %295 = vdwg.mxu0
    %296 = vmatprep.subr.bf16.mxu0 %v238
    %297 = vmatpush1.bf16.msra.mxu0 %v237
    %298 = vmatprep.subr.bf16.mxu0 %v242
    %299 = vmatpush1.bf16.msra.mxu0 %v241
    %300 = vmatprep.subr.bf16.mxu0 0
    %301 = vmatpush1.bf16.msra.mxu0 0
    %302 = vmatprep.subr.bf16.mxu0 0
    %303 = vmatpush1.bf16.msra.mxu0 0
    %304 = vmatprep.subr.bf16.mxu0 0
    %305 = vmatpush1.bf16.msra.mxu0 0
    %306 = vmatprep.subr.bf16.mxu0 0
    %307 = vmatpush1.bf16.msra.mxu0 0
    %308 = vmatprep.subr.bf16.mxu0 0
    %309 = vmatpush1.bf16.msra.mxu0 0
    %310 = vmatprep.subr.bf16.mxu0 0
    %311 = vmatpush1.bf16.msra.mxu0 0
    %312 = vmatprep.subr.bf16.mxu0 0
    %313 = vmatpush1.bf16.msra.mxu0 0
    %314 = vmatprep.subr.bf16.mxu0 0
    %315 = vmatpush1.bf16.msra.mxu0 0
    %316 = vmatprep.subr.bf16.mxu0 0
    %317 = vmatpush1.bf16.msra.mxu0 0
    %318 = vmatprep.subr.bf16.mxu0 0
    %319 = vmatpush1.bf16.msra.mxu0 0
    %320 = vmatprep.subr.bf16.mxu0 0
    %321 = vmatpush1.bf16.msra.mxu0 0
    %322 = vmatprep.subr.bf16.mxu0 0
    %323 = vmatpush1.bf16.msra.mxu0 0
    %324 = vmatprep.subr.bf16.mxu0 0
    %325 = vmatpush1.bf16.msra.mxu0 0
    %326 = vmatprep.subr.bf16.mxu0 0
    %327 = vmatpush1.bf16.msra.mxu0 0
    %328 = vmatprep.mubr.bf16.mxu0 0
    %329 = vmatmul.mubr.bf16.gmra.mrb[0].mxu0 %v253
    %v330 = vpop.f32.mrb[0].mxu0
    %v331 = vadd.f32 0.0, %v330
    %v332 = vpop.f32.mrb[0].mxu0
    %v333 = vadd.f32 0.0, %v332
    %v334 = vpop.f32.mrb[0].mxu0
    %v335 = vpop.f32.mrb[0].mxu0
    %336 = vdwg.mxu0
    %v338 = vsel %vm251, %v202, 0
    %340 = vmatprep.subr.bf16.mxu0 %v244
    %341 = vmatpush1.bf16.msra.mxu0 %v243
    %342 = vmatprep.subr.bf16.mxu0 %v248
    %343 = vmatpush1.bf16.msra.mxu0 %v247
    %344 = vmatprep.subr.bf16.mxu0 0
    %345 = vmatpush1.bf16.msra.mxu0 0
    %346 = vmatprep.subr.bf16.mxu0 0
    %347 = vmatpush1.bf16.msra.mxu0 0
    %348 = vmatprep.subr.bf16.mxu0 0
    %349 = vmatpush1.bf16.msra.mxu0 0
    %350 = vmatprep.subr.bf16.mxu0 0
    %351 = vmatpush1.bf16.msra.mxu0 0
    %352 = vmatprep.subr.bf16.mxu0 0
    %353 = vmatpush1.bf16.msra.mxu0 0
    %354 = vmatprep.subr.bf16.mxu0 0
    %355 = vmatpush1.bf16.msra.mxu0 0
    %356 = vmatprep.subr.bf16.mxu0 0
    %357 = vmatpush1.bf16.msra.mxu0 0
    %358 = vmatprep.subr.bf16.mxu0 0
    %359 = vmatpush1.bf16.msra.mxu0 0
    %360 = vmatprep.subr.bf16.mxu0 0
    %361 = vmatpush1.bf16.msra.mxu0 0
    %362 = vmatprep.subr.bf16.mxu0 0
    %363 = vmatpush1.bf16.msra.mxu0 0
    %364 = vmatprep.subr.bf16.mxu0 0
    %365 = vmatpush1.bf16.msra.mxu0 0
    %366 = vmatprep.subr.bf16.mxu0 0
    %367 = vmatpush1.bf16.msra.mxu0 0
    %368 = vmatprep.subr.bf16.mxu0 0
    %369 = vmatpush1.bf16.msra.mxu0 0
    %370 = vmatprep.subr.bf16.mxu0 0
    %371 = vmatpush1.bf16.msra.mxu0 0
    %372 = vmatprep.mubr.bf16.mxu0 0
    %373 = vmatmul.mubr.bf16.gmra.mrb[0].mxu0 %v338
    %v374 = vpop.f32.mrb[0].mxu0
    %v375 = vadd.f32 0.0, %v374
    %v376 = vpop.f32.mrb[0].mxu0
    %v377 = vadd.f32 0.0, %v376
    %v378 = vpop.f32.mrb[0].mxu0
    %v379 = vpop.f32.mrb[0].mxu0
    %380 = vdwg.mxu0
    %381 = vmatprep.subr.bf16.mxu0 %v246
    %382 = vmatpush1.bf16.msra.mxu0 %v245
    %383 = vmatprep.subr.bf16.mxu0 %v250
    %384 = vmatpush1.bf16.msra.mxu0 %v249
    %385 = vmatprep.subr.bf16.mxu0 0
    %386 = vmatpush1.bf16.msra.mxu0 0
    %387 = vmatprep.subr.bf16.mxu0 0
    %388 = vmatpush1.bf16.msra.mxu0 0
    %389 = vmatprep.subr.bf16.mxu0 0
    %390 = vmatpush1.bf16.msra.mxu0 0
    %391 = vmatprep.subr.bf16.mxu0 0
    %392 = vmatpush1.bf16.msra.mxu0 0
    %393 = vmatprep.subr.bf16.mxu0 0
    %394 = vmatpush1.bf16.msra.mxu0 0
    %395 = vmatprep.subr.bf16.mxu0 0
    %396 = vmatpush1.bf16.msra.mxu0 0
    %397 = vmatprep.subr.bf16.mxu0 0
    %398 = vmatpush1.bf16.msra.mxu0 0
    %399 = vmatprep.subr.bf16.mxu0 0
    %400 = vmatpush1.bf16.msra.mxu0 0
    %401 = vmatprep.subr.bf16.mxu0 0
    %402 = vmatpush1.bf16.msra.mxu0 0
    %403 = vmatprep.subr.bf16.mxu0 0
    %404 = vmatpush1.bf16.msra.mxu0 0
    %405 = vmatprep.subr.bf16.mxu0 0
    %406 = vmatpush1.bf16.msra.mxu0 0
    %407 = vmatprep.subr.bf16.mxu0 0
    %408 = vmatpush1.bf16.msra.mxu0 0
    %409 = vmatprep.subr.bf16.mxu0 0
    %410 = vmatpush1.bf16.msra.mxu0 0
    %411 = vmatprep.subr.bf16.mxu0 0
    %412 = vmatpush1.bf16.msra.mxu0 0
    %413 = vmatprep.mubr.bf16.mxu0 0
    %414 = vmatmul.mubr.bf16.gmra.mrb[0].mxu0 %v338
    %v415 = vpop.f32.mrb[0].mxu0
    %v416 = vadd.f32 0.0, %v415
    %v417 = vpop.f32.mrb[0].mxu0
    %v418 = vadd.f32 0.0, %v417
    %v419 = vpop.f32.mrb[0].mxu0
    %v420 = vpop.f32.mrb[0].mxu0
    %421 = vdwg.mxu0
    %v422 = vpack.c.bf16 %v375, %v290
    %v423 = vpack.c.bf16 %v377, %v292
    %v424 = vpack.c.bf16 %v416, %v331
    %v425 = vpack.c.bf16 %v418, %v333
    %v426 = vld [vmem:[#allocation8] sm:$0xff]
    %v427 = vld [vmem:[#allocation8 + $0x8] sm:$0xff]
    %v428 = vld [vmem:[#allocation8 + $0x10] sm:$0xff]
    %v429 = vld [vmem:[#allocation8 + $0x18] sm:$0xff]
    %v430 = vld [vmem:[#allocation8 + $0x20] sm:$0xff]
    %v431 = vld [vmem:[#allocation8 + $0x28] sm:$0xff]
    %v432 = vld [vmem:[#allocation8 + $0x30] sm:$0xff]
    %v433 = vld [vmem:[#allocation8 + $0x38] sm:$0xff]
    %v434 = vld [vmem:[#allocation8 + $0x40] sm:$0xff]
    %v435 = vld [vmem:[#allocation8 + $0x48] sm:$0xff]
    %v436 = vld [vmem:[#allocation8 + $0x50] sm:$0xff]
    %v437 = vld [vmem:[#allocation8 + $0x58] sm:$0xff]
    %v438 = vld [vmem:[#allocation8 + $0x60] sm:$0xff]
    %v439 = vld [vmem:[#allocation8 + $0x68] sm:$0xff]
    %v440 = vld [vmem:[#allocation8 + $0x70] sm:$0xff]
    %v441 = vld [vmem:[#allocation8 + $0x78] sm:$0xff]
    %v442 = vld [vmem:[#allocation8 + $0x80] sm:$0xff]
    %v443 = vld [vmem:[#allocation8 + $0x88] sm:$0xff]
    %v444 = vld [vmem:[#allocation8 + $0x90] sm:$0xff]
    %v445 = vld [vmem:[#allocation8 + $0x98] sm:$0xff]
    %v446 = vld [vmem:[#allocation8 + $0xa0] sm:$0xff]
    %v447 = vld [vmem:[#allocation8 + $0xa8] sm:$0xff]
    %v448 = vld [vmem:[#allocation8 + $0xb0] sm:$0xff]
    %v449 = vld [vmem:[#allocation8 + $0xb8] sm:$0xff]
    %v450 = vld [vmem:[#allocation8 + $0xc0] sm:$0xff]
    %v451 = vld [vmem:[#allocation8 + $0xc8] sm:$0xff]
    %v452 = vld [vmem:[#allocation8 + $0xd0] sm:$0xff]
    %v453 = vld [vmem:[#allocation8 + $0xd8] sm:$0xff]
    %v454 = vld [vmem:[#allocation8 + $0xe0] sm:$0xff]
    %v455 = vld [vmem:[#allocation8 + $0xe8] sm:$0xff]
    %v456 = vld [vmem:[#allocation8 + $0xf0] sm:$0xff]
    %v457 = vld [vmem:[#allocation8 + $0xf8] sm:$0xff]
    %v458 = vld [vmem:[#allocation8 + $0x100] sm:$0xff]
    %v459 = vld [vmem:[#allocation8 + $0x108] sm:$0xff]
    %v460 = vld [vmem:[#allocation8 + $0x110] sm:$0xff]
    %v461 = vld [vmem:[#allocation8 + $0x118] sm:$0xff]
    %v462 = vld [vmem:[#allocation8 + $0x120] sm:$0xff]
    %v463 = vld [vmem:[#allocation8 + $0x128] sm:$0xff]
    %v464 = vld [vmem:[#allocation8 + $0x130] sm:$0xff]
    %v465 = vld [vmem:[#allocation8 + $0x138] sm:$0xff]
    %v466 = vld [vmem:[#allocation8 + $0x140] sm:$0xff]
    %v467 = vld [vmem:[#allocation8 + $0x148] sm:$0xff]
    %v468 = vld [vmem:[#allocation8 + $0x150] sm:$0xff]
    %v469 = vld [vmem:[#allocation8 + $0x158] sm:$0xff]
    %v470 = vld [vmem:[#allocation8 + $0x160] sm:$0xff]
    %v471 = vld [vmem:[#allocation8 + $0x168] sm:$0xff]
    %v472 = vld [vmem:[#allocation8 + $0x170] sm:$0xff]
    %v473 = vld [vmem:[#allocation8 + $0x178] sm:$0xff]
    %v474 = vld [vmem:[#allocation8 + $0x180] sm:$0xff]
    %v475 = vld [vmem:[#allocation8 + $0x188] sm:$0xff]
    %v476 = vld [vmem:[#allocation8 + $0x190] sm:$0xff]
    %v477 = vld [vmem:[#allocation8 + $0x198] sm:$0xff]
    %v478 = vld [vmem:[#allocation8 + $0x1a0] sm:$0xff]
    %v479 = vld [vmem:[#allocation8 + $0x1a8] sm:$0xff]
    %v480 = vld [vmem:[#allocation8 + $0x1b0] sm:$0xff]
    %v481 = vld [vmem:[#allocation8 + $0x1b8] sm:$0xff]
    %v482 = vld [vmem:[#allocation8 + $0x1c0] sm:$0xff]
    %v483 = vld [vmem:[#allocation8 + $0x1c8] sm:$0xff]
    %v484 = vld [vmem:[#allocation8 + $0x1d0] sm:$0xff]
    %v485 = vld [vmem:[#allocation8 + $0x1d8] sm:$0xff]
    %v486 = vld [vmem:[#allocation8 + $0x1e0] sm:$0xff]
    %v487 = vld [vmem:[#allocation8 + $0x1e8] sm:$0xff]
    %v488 = vld [vmem:[#allocation8 + $0x1f0] sm:$0xff]
    %v489 = vld [vmem:[#allocation8 + $0x1f8] sm:$0xff]
    %v490 = vld [vmem:[#allocation8 + $0x200] sm:$0xff]
    %v491 = vld [vmem:[#allocation8 + $0x208] sm:$0xff]
    %v492 = vld [vmem:[#allocation8 + $0x210] sm:$0xff]
    %v493 = vld [vmem:[#allocation8 + $0x218] sm:$0xff]
    %v494 = vld [vmem:[#allocation8 + $0x220] sm:$0xff]
    %v495 = vld [vmem:[#allocation8 + $0x228] sm:$0xff]
    %v496 = vld [vmem:[#allocation8 + $0x230] sm:$0xff]
    %v497 = vld [vmem:[#allocation8 + $0x238] sm:$0xff]
    %v498 = vld [vmem:[#allocation8 + $0x240] sm:$0xff]
    %v499 = vld [vmem:[#allocation8 + $0x248] sm:$0xff]
    %v500 = vld [vmem:[#allocation8 + $0x250] sm:$0xff]
    %v501 = vld [vmem:[#allocation8 + $0x258] sm:$0xff]
    %v502 = vld [vmem:[#allocation8 + $0x260] sm:$0xff]
    %v503 = vld [vmem:[#allocation8 + $0x268] sm:$0xff]
    %v504 = vld [vmem:[#allocation8 + $0x270] sm:$0xff]
    %v505 = vld [vmem:[#allocation8 + $0x278] sm:$0xff]
    %v506 = vld [vmem:[#allocation8 + $0x280] sm:$0xff]
    %v507 = vld [vmem:[#allocation8 + $0x288] sm:$0xff]
    %v508 = vld [vmem:[#allocation8 + $0x290] sm:$0xff]
    %v509 = vld [vmem:[#allocation8 + $0x298] sm:$0xff]
    %v510 = vld [vmem:[#allocation8 + $0x2a0] sm:$0xff]
    %v511 = vld [vmem:[#allocation8 + $0x2a8] sm:$0xff]
    %v512 = vld [vmem:[#allocation8 + $0x2b0] sm:$0xff]
    %v513 = vld [vmem:[#allocation8 + $0x2b8] sm:$0xff]
    %v514 = vld [vmem:[#allocation8 + $0x2c0] sm:$0xff]
    %v515 = vld [vmem:[#allocation8 + $0x2c8] sm:$0xff]
    %v516 = vld [vmem:[#allocation8 + $0x2d0] sm:$0xff]
    %v517 = vld [vmem:[#allocation8 + $0x2d8] sm:$0xff]
    %v518 = vld [vmem:[#allocation8 + $0x2e0] sm:$0xff]
    %v519 = vld [vmem:[#allocation8 + $0x2e8] sm:$0xff]
    %v520 = vld [vmem:[#allocation8 + $0x2f0] sm:$0xff]
    %v521 = vld [vmem:[#allocation8 + $0x2f8] sm:$0xff]
    %v522 = vld [vmem:[#allocation8 + $0x300] sm:$0xff]
    %v523 = vld [vmem:[#allocation8 + $0x308] sm:$0xff]
    %v524 = vld [vmem:[#allocation8 + $0x310] sm:$0xff]
    %v525 = vld [vmem:[#allocation8 + $0x318] sm:$0xff]
    %v526 = vld [vmem:[#allocation8 + $0x320] sm:$0xff]
    %v527 = vld [vmem:[#allocation8 + $0x328] sm:$0xff]
    %v528 = vld [vmem:[#allocation8 + $0x330] sm:$0xff]
    %v529 = vld [vmem:[#allocation8 + $0x338] sm:$0xff]
    %v530 = vld [vmem:[#allocation8 + $0x340] sm:$0xff]
    %v531 = vld [vmem:[#allocation8 + $0x348] sm:$0xff]
    %v532 = vld [vmem:[#allocation8 + $0x350] sm:$0xff]
    %v533 = vld [vmem:[#allocation8 + $0x358] sm:$0xff]
    %v534 = vld [vmem:[#allocation8 + $0x360] sm:$0xff]
    %v535 = vld [vmem:[#allocation8 + $0x368] sm:$0xff]
    %v536 = vld [vmem:[#allocation8 + $0x370] sm:$0xff]
    %v537 = vld [vmem:[#allocation8 + $0x378] sm:$0xff]
    %v538 = vld [vmem:[#allocation8 + $0x380] sm:$0xff]
    %v539 = vld [vmem:[#allocation8 + $0x388] sm:$0xff]
    %v540 = vld [vmem:[#allocation8 + $0x390] sm:$0xff]
    %v541 = vld [vmem:[#allocation8 + $0x398] sm:$0xff]
    %v542 = vld [vmem:[#allocation8 + $0x3a0] sm:$0xff]
    %v543 = vld [vmem:[#allocation8 + $0x3a8] sm:$0xff]
    %v544 = vld [vmem:[#allocation8 + $0x3b0] sm:$0xff]
    %v545 = vld [vmem:[#allocation8 + $0x3b8] sm:$0xff]
    %v546 = vld [vmem:[#allocation8 + $0x3c0] sm:$0xff]
    %v547 = vld [vmem:[#allocation8 + $0x3c8] sm:$0xff]
    %v548 = vld [vmem:[#allocation8 + $0x3d0] sm:$0xff]
    %v549 = vld [vmem:[#allocation8 + $0x3d8] sm:$0xff]
    %v550 = vld [vmem:[#allocation8 + $0x3e0] sm:$0xff]
    %v551 = vld [vmem:[#allocation8 + $0x3e8] sm:$0xff]
    %v552 = vld [vmem:[#allocation8 + $0x3f0] sm:$0xff]
    %v553 = vld [vmem:[#allocation8 + $0x3f8] sm:$0xff]
    %v554 = vld [vmem:[%s5] sm:$0xf]
    %v556 = vlaneseq
    %v557 = vshrl.u32 %v556, 7
    %v558 = vsub.s32 0, %v557
    %v559 = vrot.slane %v554, %v558
    %v560 = vlaneseq
    %v561 = vshrl.u32 %v560, 7
    %v562 = vsub.s32 1, %v561
    %v563 = vrot.slane %v554, %v562
    %v564 = vlaneseq
    %v565 = vshrl.u32 %v564, 7
    %v566 = vsub.s32 2, %v565
    %v567 = vrot.slane %v554, %v566
    %v568 = vlaneseq
    %v569 = vshrl.u32 %v568, 7
    %v570 = vsub.s32 3, %v569
    %v571 = vrot.slane %v554, %v570
    %v704 = vunpack.c.l.b16 %v426
    %v705 = vunpack.c.h.b16 %v426
    %v706 = vunpack.c.l.b16 %v427
    %v707 = vunpack.c.h.b16 %v427
    %v708 = vunpack.c.l.b16 %v428
    %v709 = vunpack.c.h.b16 %v428
    %v710 = vunpack.c.l.b16 %v429
    %v711 = vunpack.c.h.b16 %v429
    %v712 = vunpack.c.l.b16 %v430
    %v713 = vunpack.c.h.b16 %v430
    %v714 = vunpack.c.l.b16 %v431
    %v715 = vunpack.c.h.b16 %v431
    %v716 = vunpack.c.l.b16 %v432
    %v717 = vunpack.c.h.b16 %v432
    %v718 = vunpack.c.l.b16 %v433
    %v719 = vunpack.c.h.b16 %v433
    %v720 = vunpack.c.l.b16 %v434
    %v721 = vunpack.c.h.b16 %v434
    %v722 = vunpack.c.l.b16 %v435
    %v723 = vunpack.c.h.b16 %v435
    %v724 = vunpack.c.l.b16 %v436
    %v725 = vunpack.c.h.b16 %v436
    %v726 = vunpack.c.l.b16 %v437
    %v727 = vunpack.c.h.b16 %v437
    %v728 = vunpack.c.l.b16 %v438
    %v729 = vunpack.c.h.b16 %v438
    %v730 = vunpack.c.l.b16 %v439
    %v731 = vunpack.c.h.b16 %v439
    %v732 = vunpack.c.l.b16 %v440
    %v733 = vunpack.c.h.b16 %v440
    %v734 = vunpack.c.l.b16 %v441
    %v735 = vunpack.c.h.b16 %v441
    %v736 = vunpack.c.l.b16 %v442
    %v737 = vunpack.c.h.b16 %v442
    %v738 = vunpack.c.l.b16 %v443
    %v739 = vunpack.c.h.b16 %v443
    %v740 = vunpack.c.l.b16 %v444
    %v741 = vunpack.c.h.b16 %v444
    %v742 = vunpack.c.l.b16 %v445
    %v743 = vunpack.c.h.b16 %v445
    %v744 = vunpack.c.l.b16 %v446
    %v745 = vunpack.c.h.b16 %v446
    %v746 = vunpack.c.l.b16 %v447
    %v747 = vunpack.c.h.b16 %v447
    %v748 = vunpack.c.l.b16 %v448
    %v749 = vunpack.c.h.b16 %v448
    %v750 = vunpack.c.l.b16 %v449
    %v751 = vunpack.c.h.b16 %v449
    %v752 = vunpack.c.l.b16 %v450
    %v753 = vunpack.c.h.b16 %v450
    %v754 = vunpack.c.l.b16 %v451
    %v755 = vunpack.c.h.b16 %v451
    %v756 = vunpack.c.l.b16 %v452
    %v757 = vunpack.c.h.b16 %v452
    %v758 = vunpack.c.l.b16 %v453
    %v759 = vunpack.c.h.b16 %v453
    %v760 = vunpack.c.l.b16 %v454
    %v761 = vunpack.c.h.b16 %v454
    %v762 = vunpack.c.l.b16 %v455
    %v763 = vunpack.c.h.b16 %v455
    %v764 = vunpack.c.l.b16 %v456
    %v765 = vunpack.c.h.b16 %v456
    %v766 = vunpack.c.l.b16 %v457
    %v767 = vunpack.c.h.b16 %v457
    %v768 = vunpack.c.l.b16 %v458
    %v769 = vunpack.c.h.b16 %v458
    %v770 = vunpack.c.l.b16 %v459
    %v771 = vunpack.c.h.b16 %v459
    %v772 = vunpack.c.l.b16 %v460
    %v773 = vunpack.c.h.b16 %v460
    %v774 = vunpack.c.l.b16 %v461
    %v775 = vunpack.c.h.b16 %v461
    %v776 = vunpack.c.l.b16 %v462
    %v777 = vunpack.c.h.b16 %v462
    %v778 = vunpack.c.l.b16 %v463
    %v779 = vunpack.c.h.b16 %v463
    %v780 = vunpack.c.l.b16 %v464
    %v781 = vunpack.c.h.b16 %v464
    %v782 = vunpack.c.l.b16 %v465
    %v783 = vunpack.c.h.b16 %v465
    %v784 = vunpack.c.l.b16 %v466
    %v785 = vunpack.c.h.b16 %v466
    %v786 = vunpack.c.l.b16 %v467
    %v787 = vunpack.c.h.b16 %v467
    %v788 = vunpack.c.l.b16 %v468
    %v789 = vunpack.c.h.b16 %v468
    %v790 = vunpack.c.l.b16 %v469
    %v791 = vunpack.c.h.b16 %v469
    %v792 = vunpack.c.l.b16 %v470
    %v793 = vunpack.c.h.b16 %v470
    %v794 = vunpack.c.l.b16 %v471
    %v795 = vunpack.c.h.b16 %v471
    %v796 = vunpack.c.l.b16 %v472
    %v797 = vunpack.c.h.b16 %v472
    %v798 = vunpack.c.l.b16 %v473
    %v799 = vunpack.c.h.b16 %v473
    %v800 = vunpack.c.l.b16 %v474
    %v801 = vunpack.c.h.b16 %v474
    %v802 = vunpack.c.l.b16 %v475
    %v803 = vunpack.c.h.b16 %v475
    %v804 = vunpack.c.l.b16 %v476
    %v805 = vunpack.c.h.b16 %v476
    %v806 = vunpack.c.l.b16 %v477
    %v807 = vunpack.c.h.b16 %v477
    %v808 = vunpack.c.l.b16 %v478
    %v809 = vunpack.c.h.b16 %v478
    %v810 = vunpack.c.l.b16 %v479
    %v811 = vunpack.c.h.b16 %v479
    %v812 = vunpack.c.l.b16 %v480
    %v813 = vunpack.c.h.b16 %v480
    %v814 = vunpack.c.l.b16 %v481
    %v815 = vunpack.c.h.b16 %v481
    %v816 = vunpack.c.l.b16 %v482
    %v817 = vunpack.c.h.b16 %v482
    %v818 = vunpack.c.l.b16 %v483
    %v819 = vunpack.c.h.b16 %v483
    %v820 = vunpack.c.l.b16 %v484
    %v821 = vunpack.c.h.b16 %v484
    %v822 = vunpack.c.l.b16 %v485
    %v823 = vunpack.c.h.b16 %v485
    %v824 = vunpack.c.l.b16 %v486
    %v825 = vunpack.c.h.b16 %v486
    %v826 = vunpack.c.l.b16 %v487
    %v827 = vunpack.c.h.b16 %v487
    %v828 = vunpack.c.l.b16 %v488
    %v829 = vunpack.c.h.b16 %v488
    %v830 = vunpack.c.l.b16 %v489
    %v831 = vunpack.c.h.b16 %v489
    %v832 = vunpack.c.l.b16 %v490
    %v833 = vunpack.c.h.b16 %v490
    %v834 = vunpack.c.l.b16 %v491
    %v835 = vunpack.c.h.b16 %v491
    %v836 = vunpack.c.l.b16 %v492
    %v837 = vunpack.c.h.b16 %v492
    %v838 = vunpack.c.l.b16 %v493
    %v839 = vunpack.c.h.b16 %v493
    %v840 = vunpack.c.l.b16 %v494
    %v841 = vunpack.c.h.b16 %v494
    %v842 = vunpack.c.l.b16 %v495
    %v843 = vunpack.c.h.b16 %v495
    %v844 = vunpack.c.l.b16 %v496
    %v845 = vunpack.c.h.b16 %v496
    %v846 = vunpack.c.l.b16 %v497
    %v847 = vunpack.c.h.b16 %v497
    %v848 = vunpack.c.l.b16 %v498
    %v849 = vunpack.c.h.b16 %v498
    %v850 = vunpack.c.l.b16 %v499
    %v851 = vunpack.c.h.b16 %v499
    %v852 = vunpack.c.l.b16 %v500
    %v853 = vunpack.c.h.b16 %v500
    %v854 = vunpack.c.l.b16 %v501
    %v855 = vunpack.c.h.b16 %v501
    %v856 = vunpack.c.l.b16 %v502
    %v857 = vunpack.c.h.b16 %v502
    %v858 = vunpack.c.l.b16 %v503
    %v859 = vunpack.c.h.b16 %v503
    %v860 = vunpack.c.l.b16 %v504
    %v861 = vunpack.c.h.b16 %v504
    %v862 = vunpack.c.l.b16 %v505
    %v863 = vunpack.c.h.b16 %v505
    %v864 = vunpack.c.l.b16 %v506
    %v865 = vunpack.c.h.b16 %v506
    %v866 = vunpack.c.l.b16 %v507
    %v867 = vunpack.c.h.b16 %v507
    %v868 = vunpack.c.l.b16 %v508
    %v869 = vunpack.c.h.b16 %v508
    %v870 = vunpack.c.l.b16 %v509
    %v871 = vunpack.c.h.b16 %v509
    %v872 = vunpack.c.l.b16 %v510
    %v873 = vunpack.c.h.b16 %v510
    %v874 = vunpack.c.l.b16 %v511
    %v875 = vunpack.c.h.b16 %v511
    %v876 = vunpack.c.l.b16 %v512
    %v877 = vunpack.c.h.b16 %v512
    %v878 = vunpack.c.l.b16 %v513
    %v879 = vunpack.c.h.b16 %v513
    %v880 = vunpack.c.l.b16 %v514
    %v881 = vunpack.c.h.b16 %v514
    %v882 = vunpack.c.l.b16 %v515
    %v883 = vunpack.c.h.b16 %v515
    %v884 = vunpack.c.l.b16 %v516
    %v885 = vunpack.c.h.b16 %v516
    %v886 = vunpack.c.l.b16 %v517
    %v887 = vunpack.c.h.b16 %v517
    %v888 = vunpack.c.l.b16 %v518
    %v889 = vunpack.c.h.b16 %v518
    %v890 = vunpack.c.l.b16 %v519
    %v891 = vunpack.c.h.b16 %v519
    %v892 = vunpack.c.l.b16 %v520
    %v893 = vunpack.c.h.b16 %v520
    %v894 = vunpack.c.l.b16 %v521
    %v895 = vunpack.c.h.b16 %v521
    %v896 = vunpack.c.l.b16 %v522
    %v897 = vunpack.c.h.b16 %v522
    %v898 = vunpack.c.l.b16 %v523
    %v899 = vunpack.c.h.b16 %v523
    %v900 = vunpack.c.l.b16 %v524
    %v901 = vunpack.c.h.b16 %v524
    %v902 = vunpack.c.l.b16 %v525
    %v903 = vunpack.c.h.b16 %v525
    %v904 = vunpack.c.l.b16 %v526
    %v905 = vunpack.c.h.b16 %v526
    %v906 = vunpack.c.l.b16 %v527
    %v907 = vunpack.c.h.b16 %v527
    %v908 = vunpack.c.l.b16 %v528
    %v909 = vunpack.c.h.b16 %v528
    %v910 = vunpack.c.l.b16 %v529
    %v911 = vunpack.c.h.b16 %v529
    %v912 = vunpack.c.l.b16 %v530
    %v913 = vunpack.c.h.b16 %v530
    %v914 = vunpack.c.l.b16 %v531
    %v915 = vunpack.c.h.b16 %v531
    %v916 = vunpack.c.l.b16 %v532
    %v917 = vunpack.c.h.b16 %v532
    %v918 = vunpack.c.l.b16 %v533
    %v919 = vunpack.c.h.b16 %v533
    %v920 = vunpack.c.l.b16 %v534
    %v921 = vunpack.c.h.b16 %v534
    %v922 = vunpack.c.l.b16 %v535
    %v923 = vunpack.c.h.b16 %v535
    %v924 = vunpack.c.l.b16 %v536
    %v925 = vunpack.c.h.b16 %v536
    %v926 = vunpack.c.l.b16 %v537
    %v927 = vunpack.c.h.b16 %v537
    %v928 = vunpack.c.l.b16 %v538
    %v929 = vunpack.c.h.b16 %v538
    %v930 = vunpack.c.l.b16 %v539
    %v931 = vunpack.c.h.b16 %v539
    %v932 = vunpack.c.l.b16 %v540
    %v933 = vunpack.c.h.b16 %v540
    %v934 = vunpack.c.l.b16 %v541
    %v935 = vunpack.c.h.b16 %v541
    %v936 = vunpack.c.l.b16 %v542
    %v937 = vunpack.c.h.b16 %v542
    %v938 = vunpack.c.l.b16 %v543
    %v939 = vunpack.c.h.b16 %v543
    %v940 = vunpack.c.l.b16 %v544
    %v941 = vunpack.c.h.b16 %v544
    %v942 = vunpack.c.l.b16 %v545
    %v943 = vunpack.c.h.b16 %v545
    %v944 = vunpack.c.l.b16 %v546
    %v945 = vunpack.c.h.b16 %v546
    %v946 = vunpack.c.l.b16 %v547
    %v947 = vunpack.c.h.b16 %v547
    %v948 = vunpack.c.l.b16 %v548
    %v949 = vunpack.c.h.b16 %v548
    %v950 = vunpack.c.l.b16 %v549
    %v951 = vunpack.c.h.b16 %v549
    %v952 = vunpack.c.l.b16 %v550
    %v953 = vunpack.c.h.b16 %v550
    %v954 = vunpack.c.l.b16 %v551
    %v955 = vunpack.c.h.b16 %v551
    %v956 = vunpack.c.l.b16 %v552
    %v957 = vunpack.c.h.b16 %v552
    %v958 = vunpack.c.l.b16 %v553
    %v959 = vunpack.c.h.b16 %v553
    %v960 = vpack.c.b16 %v708, %v704
    %v961 = vpack.c.b16 %v709, %v705
    %v962 = vpack.c.b16 %v710, %v706
    %v963 = vpack.c.b16 %v711, %v707
    %v964 = vpack.c.b16 %v716, %v712
    %v965 = vpack.c.b16 %v717, %v713
    %v966 = vpack.c.b16 %v718, %v714
    %v967 = vpack.c.b16 %v719, %v715
    %v968 = vpack.c.b16 %v724, %v720
    %v969 = vpack.c.b16 %v725, %v721
    %v970 = vpack.c.b16 %v726, %v722
    %v971 = vpack.c.b16 %v727, %v723
    %v972 = vpack.c.b16 %v732, %v728
    %v973 = vpack.c.b16 %v733, %v729
    %v974 = vpack.c.b16 %v734, %v730
    %v975 = vpack.c.b16 %v735, %v731
    %v976 = vpack.c.b16 %v740, %v736
    %v977 = vpack.c.b16 %v741, %v737
    %v978 = vpack.c.b16 %v742, %v738
    %v979 = vpack.c.b16 %v743, %v739
    %v980 = vpack.c.b16 %v748, %v744
    %v981 = vpack.c.b16 %v749, %v745
    %v982 = vpack.c.b16 %v750, %v746
    %v983 = vpack.c.b16 %v751, %v747
    %v984 = vpack.c.b16 %v756, %v752
    %v985 = vpack.c.b16 %v757, %v753
    %v986 = vpack.c.b16 %v758, %v754
    %v987 = vpack.c.b16 %v759, %v755
    %v988 = vpack.c.b16 %v764, %v760
    %v989 = vpack.c.b16 %v765, %v761
    %v990 = vpack.c.b16 %v766, %v762
    %v991 = vpack.c.b16 %v767, %v763
    %v992 = vpack.c.b16 %v772, %v768
    %v993 = vpack.c.b16 %v773, %v769
    %v994 = vpack.c.b16 %v774, %v770
    %v995 = vpack.c.b16 %v775, %v771
    %v996 = vpack.c.b16 %v780, %v776
    %v997 = vpack.c.b16 %v781, %v777
    %v998 = vpack.c.b16 %v782, %v778
    %v999 = vpack.c.b16 %v783, %v779
    %v1000 = vpack.c.b16 %v788, %v784
    %v1001 = vpack.c.b16 %v789, %v785
    %v1002 = vpack.c.b16 %v790, %v786
    %v1003 = vpack.c.b16 %v791, %v787
    %v1004 = vpack.c.b16 %v796, %v792
    %v1005 = vpack.c.b16 %v797, %v793
    %v1006 = vpack.c.b16 %v798, %v794
    %v1007 = vpack.c.b16 %v799, %v795
    %v1008 = vpack.c.b16 %v804, %v800
    %v1009 = vpack.c.b16 %v805, %v801
    %v1010 = vpack.c.b16 %v806, %v802
    %v1011 = vpack.c.b16 %v807, %v803
    %v1012 = vpack.c.b16 %v812, %v808
    %v1013 = vpack.c.b16 %v813, %v809
    %v1014 = vpack.c.b16 %v814, %v810
    %v1015 = vpack.c.b16 %v815, %v811
    %v1016 = vpack.c.b16 %v820, %v816
    %v1017 = vpack.c.b16 %v821, %v817
    %v1018 = vpack.c.b16 %v822, %v818
    %v1019 = vpack.c.b16 %v823, %v819
    %v1020 = vpack.c.b16 %v828, %v824
    %v1021 = vpack.c.b16 %v829, %v825
    %v1022 = vpack.c.b16 %v830, %v826
    %v1023 = vpack.c.b16 %v831, %v827
    %v1024 = vpack.c.b16 %v836, %v832
    %v1025 = vpack.c.b16 %v837, %v833
    %v1026 = vpack.c.b16 %v838, %v834
    %v1027 = vpack.c.b16 %v839, %v835
    %v1028 = vpack.c.b16 %v844, %v840
    %v1029 = vpack.c.b16 %v845, %v841
    %v1030 = vpack.c.b16 %v846, %v842
    %v1031 = vpack.c.b16 %v847, %v843
    %v1032 = vpack.c.b16 %v852, %v848
    %v1033 = vpack.c.b16 %v853, %v849
    %v1034 = vpack.c.b16 %v854, %v850
    %v1035 = vpack.c.b16 %v855, %v851
    %v1036 = vpack.c.b16 %v860, %v856
    %v1037 = vpack.c.b16 %v861, %v857
    %v1038 = vpack.c.b16 %v862, %v858
    %v1039 = vpack.c.b16 %v863, %v859
    %v1040 = vpack.c.b16 %v868, %v864
    %v1041 = vpack.c.b16 %v869, %v865
    %v1042 = vpack.c.b16 %v870, %v866
    %v1043 = vpack.c.b16 %v871, %v867
    %v1044 = vpack.c.b16 %v876, %v872
    %v1045 = vpack.c.b16 %v877, %v873
    %v1046 = vpack.c.b16 %v878, %v874
    %v1047 = vpack.c.b16 %v879, %v875
    %v1048 = vpack.c.b16 %v884, %v880
    %v1049 = vpack.c.b16 %v885, %v881
    %v1050 = vpack.c.b16 %v886, %v882
    %v1051 = vpack.c.b16 %v887, %v883
    %v1052 = vpack.c.b16 %v892, %v888
    %v1053 = vpack.c.b16 %v893, %v889
    %v1054 = vpack.c.b16 %v894, %v890
    %v1055 = vpack.c.b16 %v895, %v891
    %v1056 = vpack.c.b16 %v900, %v896
    %v1057 = vpack.c.b16 %v901, %v897
    %v1058 = vpack.c.b16 %v902, %v898
    %v1059 = vpack.c.b16 %v903, %v899
    %v1060 = vpack.c.b16 %v908, %v904
    %v1061 = vpack.c.b16 %v909, %v905
    %v1062 = vpack.c.b16 %v910, %v906
    %v1063 = vpack.c.b16 %v911, %v907
    %v1064 = vpack.c.b16 %v916, %v912
    %v1065 = vpack.c.b16 %v917, %v913
    %v1066 = vpack.c.b16 %v918, %v914
    %v1067 = vpack.c.b16 %v919, %v915
    %v1068 = vpack.c.b16 %v924, %v920
    %v1069 = vpack.c.b16 %v925, %v921
    %v1070 = vpack.c.b16 %v926, %v922
    %v1071 = vpack.c.b16 %v927, %v923
    %v1072 = vpack.c.b16 %v932, %v928
    %v1073 = vpack.c.b16 %v933, %v929
    %v1074 = vpack.c.b16 %v934, %v930
    %v1075 = vpack.c.b16 %v935, %v931
    %v1076 = vpack.c.b16 %v940, %v936
    %v1077 = vpack.c.b16 %v941, %v937
    %v1078 = vpack.c.b16 %v942, %v938
    %v1079 = vpack.c.b16 %v943, %v939
    %v1080 = vpack.c.b16 %v948, %v944
    %v1081 = vpack.c.b16 %v949, %v945
    %v1082 = vpack.c.b16 %v950, %v946
    %v1083 = vpack.c.b16 %v951, %v947
    %v1084 = vpack.c.b16 %v956, %v952
    %v1085 = vpack.c.b16 %v957, %v953
    %v1086 = vpack.c.b16 %v958, %v954
    %v1087 = vpack.c.b16 %v959, %v955
    %1216 = vmatprep.subr.bf16.mxu0 %v961
    %1217 = vmatpush1.bf16.msra.mxu0 %v960
    %1218 = vmatprep.subr.bf16.mxu0 %v965
    %1219 = vmatpush1.bf16.msra.mxu0 %v964
    %1220 = vmatprep.subr.bf16.mxu0 %v969
    %1221 = vmatpush1.bf16.msra.mxu0 %v968
    %1222 = vmatprep.subr.bf16.mxu0 %v973
    %1223 = vmatpush1.bf16.msra.mxu0 %v972
    %1224 = vmatprep.subr.bf16.mxu0 %v977
    %1225 = vmatpush1.bf16.msra.mxu0 %v976
    %1226 = vmatprep.subr.bf16.mxu0 %v981
    %1227 = vmatpush1.bf16.msra.mxu0 %v980
    %1228 = vmatprep.subr.bf16.mxu0 %v985
    %1229 = vmatpush1.bf16.msra.mxu0 %v984
    %1230 = vmatprep.subr.bf16.mxu0 %v989
    %1231 = vmatpush1.bf16.msra.mxu0 %v988
    %1232 = vmatprep.subr.bf16.mxu0 %v993
    %1233 = vmatpush1.bf16.msra.mxu0 %v992
    %1234 = vmatprep.subr.bf16.mxu0 %v997
    %1235 = vmatpush1.bf16.msra.mxu0 %v996
    %1236 = vmatprep.subr.bf16.mxu0 %v1001
    %1237 = vmatpush1.bf16.msra.mxu0 %v1000
    %1238 = vmatprep.subr.bf16.mxu0 %v1005
    %1239 = vmatpush1.bf16.msra.mxu0 %v1004
    %1240 = vmatprep.subr.bf16.mxu0 %v1009
    %1241 = vmatpush1.bf16.msra.mxu0 %v1008
    %1242 = vmatprep.subr.bf16.mxu0 %v1013
    %1243 = vmatpush1.bf16.msra.mxu0 %v1012
    %1244 = vmatprep.subr.bf16.mxu0 %v1017
    %1245 = vmatpush1.bf16.msra.mxu0 %v1016
    %1246 = vmatprep.subr.bf16.mxu0 %v1021
    %1247 = vmatpush1.bf16.msra.mxu0 %v1020
    %1248 = vmatprep.mubr.bf16.mxu0 %v423
    %1249 = vmatmul.mubr.bf16.gmra.mrb[0].mxu0 %v422
    %v1250 = vpop.f32.mrb[0].mxu0
    %v1251 = vadd.f32 %v559, %v1250
    %v1252 = vpop.f32.mrb[0].mxu0
    %v1253 = vadd.f32 %v563, %v1252
    %v1254 = vpop.f32.mrb[0].mxu0
    %v1255 = vadd.f32 %v559, %v1254
    %v1256 = vpop.f32.mrb[0].mxu0
    %v1257 = vadd.f32 %v563, %v1256
    %1258 = vdwg.mxu0
    %1259 = vmatprep.subr.bf16.mxu0 %v1025
    %1260 = vmatpush1.bf16.msra.mxu0 %v1024
    %1261 = vmatprep.subr.bf16.mxu0 %v1029
    %1262 = vmatpush1.bf16.msra.mxu0 %v1028
    %1263 = vmatprep.subr.bf16.mxu0 %v1033
    %1264 = vmatpush1.bf16.msra.mxu0 %v1032
    %1265 = vmatprep.subr.bf16.mxu0 %v1037
    %1266 = vmatpush1.bf16.msra.mxu0 %v1036
    %1267 = vmatprep.subr.bf16.mxu0 %v1041
    %1268 = vmatpush1.bf16.msra.mxu0 %v1040
    %1269 = vmatprep.subr.bf16.mxu0 %v1045
    %1270 = vmatpush1.bf16.msra.mxu0 %v1044
    %1271 = vmatprep.subr.bf16.mxu0 %v1049
    %1272 = vmatpush1.bf16.msra.mxu0 %v1048
    %1273 = vmatprep.subr.bf16.mxu0 %v1053
    %1274 = vmatpush1.bf16.msra.mxu0 %v1052
    %1275 = vmatprep.subr.bf16.mxu0 %v1057
    %1276 = vmatpush1.bf16.msra.mxu0 %v1056
    %1277 = vmatprep.subr.bf16.mxu0 %v1061
    %1278 = vmatpush1.bf16.msra.mxu0 %v1060
    %1279 = vmatprep.subr.bf16.mxu0 %v1065
    %1280 = vmatpush1.bf16.msra.mxu0 %v1064
    %1281 = vmatprep.subr.bf16.mxu0 %v1069
    %1282 = vmatpush1.bf16.msra.mxu0 %v1068
    %1283 = vmatprep.subr.bf16.mxu0 %v1073
    %1284 = vmatpush1.bf16.msra.mxu0 %v1072
    %1285 = vmatprep.subr.bf16.mxu0 %v1077
    %1286 = vmatpush1.bf16.msra.mxu0 %v1076
    %1287 = vmatprep.subr.bf16.mxu0 %v1081
    %1288 = vmatpush1.bf16.msra.mxu0 %v1080
    %1289 = vmatprep.subr.bf16.mxu0 %v1085
    %1290 = vmatpush1.bf16.msra.mxu0 %v1084
    %1291 = vmatprep.mubr.bf16.mxu0 %v425
    %1292 = vmatmul.mubr.bf16.gmra.mrb[0].mxu0 %v424
    %v1293 = vpop.f32.mrb[0].mxu0
    %v1294 = vadd.f32 %v1251, %v1293
    %v1295 = vpop.f32.mrb[0].mxu0
    %v1296 = vadd.f32 %v1253, %v1295
    %v1297 = vpop.f32.mrb[0].mxu0
    %v1298 = vadd.f32 %v1255, %v1297
    %v1299 = vpop.f32.mrb[0].mxu0
    %v1300 = vadd.f32 %v1257, %v1299
    %1301 = vdwg.mxu0
    %1302 = vmatprep.subr.bf16.mxu0 %v963
    %1303 = vmatpush1.bf16.msra.mxu0 %v962
    %1304 = vmatprep.subr.bf16.mxu0 %v967
    %1305 = vmatpush1.bf16.msra.mxu0 %v966
    %1306 = vmatprep.subr.bf16.mxu0 %v971
    %1307 = vmatpush1.bf16.msra.mxu0 %v970
    %1308 = vmatprep.subr.bf16.mxu0 %v975
    %1309 = vmatpush1.bf16.msra.mxu0 %v974
    %1310 = vmatprep.subr.bf16.mxu0 %v979
    %1311 = vmatpush1.bf16.msra.mxu0 %v978
    %1312 = vmatprep.subr.bf16.mxu0 %v983
    %1313 = vmatpush1.bf16.msra.mxu0 %v982
    %1314 = vmatprep.subr.bf16.mxu0 %v987
    %1315 = vmatpush1.bf16.msra.mxu0 %v986
    %1316 = vmatprep.subr.bf16.mxu0 %v991
    %1317 = vmatpush1.bf16.msra.mxu0 %v990
    %1318 = vmatprep.subr.bf16.mxu0 %v995
    %1319 = vmatpush1.bf16.msra.mxu0 %v994
    %1320 = vmatprep.subr.bf16.mxu0 %v999
    %1321 = vmatpush1.bf16.msra.mxu0 %v998
    %1322 = vmatprep.subr.bf16.mxu0 %v1003
    %1323 = vmatpush1.bf16.msra.mxu0 %v1002
    %1324 = vmatprep.subr.bf16.mxu0 %v1007
    %1325 = vmatpush1.bf16.msra.mxu0 %v1006
    %1326 = vmatprep.subr.bf16.mxu0 %v1011
    %1327 = vmatpush1.bf16.msra.mxu0 %v1010
    %1328 = vmatprep.subr.bf16.mxu0 %v1015
    %1329 = vmatpush1.bf16.msra.mxu0 %v1014
    %1330 = vmatprep.subr.bf16.mxu0 %v1019
    %1331 = vmatpush1.bf16.msra.mxu0 %v1018
    %1332 = vmatprep.subr.bf16.mxu0 %v1023
    %1333 = vmatpush1.bf16.msra.mxu0 %v1022
    %1334 = vmatprep.mubr.bf16.mxu0 %v423
    %1335 = vmatmul.mubr.bf16.gmra.mrb[0].mxu0 %v422
    %v1336 = vpop.f32.mrb[0].mxu0
    %v1337 = vadd.f32 %v567, %v1336
    %v1338 = vpop.f32.mrb[0].mxu0
    %v1339 = vadd.f32 %v571, %v1338
    %v1340 = vpop.f32.mrb[0].mxu0
    %v1341 = vadd.f32 %v567, %v1340
    %v1342 = vpop.f32.mrb[0].mxu0
    %v1343 = vadd.f32 %v571, %v1342
    %1344 = vdwg.mxu0
    %1345 = vmatprep.subr.bf16.mxu0 %v1027
    %1346 = vmatpush1.bf16.msra.mxu0 %v1026
    %1347 = vmatprep.subr.bf16.mxu0 %v1031
    %1348 = vmatpush1.bf16.msra.mxu0 %v1030
    %1349 = vmatprep.subr.bf16.mxu0 %v1035
    %1350 = vmatpush1.bf16.msra.mxu0 %v1034
    %1351 = vmatprep.subr.bf16.mxu0 %v1039
    %1352 = vmatpush1.bf16.msra.mxu0 %v1038
    %1353 = vmatprep.subr.bf16.mxu0 %v1043
    %1354 = vmatpush1.bf16.msra.mxu0 %v1042
    %1355 = vmatprep.subr.bf16.mxu0 %v1047
    %1356 = vmatpush1.bf16.msra.mxu0 %v1046
    %1357 = vmatprep.subr.bf16.mxu0 %v1051
    %1358 = vmatpush1.bf16.msra.mxu0 %v1050
    %1359 = vmatprep.subr.bf16.mxu0 %v1055
    %1360 = vmatpush1.bf16.msra.mxu0 %v1054
    %1361 = vmatprep.subr.bf16.mxu0 %v1059
    %1362 = vmatpush1.bf16.msra.mxu0 %v1058
    %1363 = vmatprep.subr.bf16.mxu0 %v1063
    %1364 = vmatpush1.bf16.msra.mxu0 %v1062
    %1365 = vmatprep.subr.bf16.mxu0 %v1067
    %1366 = vmatpush1.bf16.msra.mxu0 %v1066
    %1367 = vmatprep.subr.bf16.mxu0 %v1071
    %1368 = vmatpush1.bf16.msra.mxu0 %v1070
    %1369 = vmatprep.subr.bf16.mxu0 %v1075
    %1370 = vmatpush1.bf16.msra.mxu0 %v1074
    %1371 = vmatprep.subr.bf16.mxu0 %v1079
    %1372 = vmatpush1.bf16.msra.mxu0 %v1078
    %1373 = vmatprep.subr.bf16.mxu0 %v1083
    %1374 = vmatpush1.bf16.msra.mxu0 %v1082
    %1375 = vmatprep.subr.bf16.mxu0 %v1087
    %1376 = vmatpush1.bf16.msra.mxu0 %v1086
    %1377 = vmatprep.mubr.bf16.mxu0 %v425
    %1378 = vmatmul.mubr.bf16.gmra.mrb[0].mxu0 %v424
    %v1379 = vpop.f32.mrb[0].mxu0
    %v1380 = vadd.f32 %v1337, %v1379
    %v1381 = vpop.f32.mrb[0].mxu0
    %v1382 = vadd.f32 %v1339, %v1381
    %v1383 = vpop.f32.mrb[0].mxu0
    %v1384 = vadd.f32 %v1341, %v1383
    %v1385 = vpop.f32.mrb[0].mxu0
    %v1386 = vadd.f32 %v1343, %v1385
    %1387 = vdwg.mxu0
    %v1388 = vmax.f32 %v1294, %v1380
    %v1389 = vmax.f32 %v1296, %v1382
    %v1390 = vmax.f32 %v1388, %v1389
    %1391 = vmax.xlane.f32.xlu0 %v1390
    %v1392 = vpop.xlane.xlu0 %1391
    %v1393 = vmax.f32 %v1298, %v1384
    %v1394 = vmax.f32 %v1300, %v1386
    %v1395 = vmax.f32 %v1393, %v1394
    %1396 = vmax.xlane.f32.xlu0 %v1395
    %v1397 = vpop.xlane.xlu0 %1396
    %v1398 = vsub.f32 %v1294, %v1392
    %v1399 = vsub.f32 %v1296, %v1392
    %v1400 = vsub.f32 %v1380, %v1392
    %v1401 = vsub.f32 %v1382, %v1392
    %v1402 = vsub.f32 %v1298, %v1397
    %v1403 = vsub.f32 %v1300, %v1397
    %v1404 = vsub.f32 %v1384, %v1397
    %v1405 = vsub.f32 %v1386, %v1397
    %v1406 = vmul.f32 %v1398, 1.442695
    %v1407 = vpow.pop %v1406
    %v1408 = vmul.f32 %v1399, 1.442695
    %v1409 = vpow.pop %v1408
    %v1410 = vmul.f32 %v1400, 1.442695
    %v1411 = vpow.pop %v1410
    %v1412 = vmul.f32 %v1401, 1.442695
    %v1413 = vpow.pop %v1412
    %v1414 = vmul.f32 %v1402, 1.442695
    %v1415 = vpow.pop %v1414
    %v1416 = vmul.f32 %v1403, 1.442695
    %v1417 = vpow.pop %v1416
    %v1418 = vmul.f32 %v1404, 1.442695
    %v1419 = vpow.pop %v1418
    %v1420 = vmul.f32 %v1405, 1.442695
    %v1421 = vpow.pop %v1420
    %v1422 = vadd.f32 %v1407, %v1409
    %v1423 = vadd.f32 %v1422, %v1411
    %v1424 = vadd.f32 %v1423, %v1413
    %1425 = vadd.xlane.f32.xlu0 %v1424
    %v1426 = vpop.xlane.xlu0 %1425
    %v1427 = vadd.f32 %v1415, %v1417
    %v1428 = vadd.f32 %v1427, %v1419
    %v1429 = vadd.f32 %v1428, %v1421
    %1430 = vadd.xlane.f32.xlu0 %v1429
    %v1431 = vpop.xlane.xlu0 %1430
    %v1432 = vrcp.pop %v1426
    %v1433 = vmul.f32 %v1407, %v1432
    %v1434 = vmul.f32 %v1409, %v1432
    %v1435 = vmul.f32 %v1411, %v1432
    %v1436 = vmul.f32 %v1413, %v1432
    %v1437 = vrcp.pop %v1431
    %v1438 = vmul.f32 %v1415, %v1437
    %v1439 = vmul.f32 %v1417, %v1437
    %v1440 = vmul.f32 %v1419, %v1437
    %v1441 = vmul.f32 %v1421, %v1437
    %1442 = vxpose.xlu0.b32.start [1/16] %v195, 128
    %1443 = vxpose.xlu0.b32.cont [2/16] 0.0, 128
    %1444 = vxpose.xlu0.b32.cont [3/16] 0.0, 128
    %1445 = vxpose.xlu0.b32.cont [4/16] 0.0, 128
    %1446 = vxpose.xlu0.b32.cont [5/16] 0.0, 128
    %1447 = vxpose.xlu0.b32.cont [6/16] 0.0, 128
    %1448 = vxpose.xlu0.b32.cont [7/16] 0.0, 128
    %1449 = vxpose.xlu0.b32.cont [8/16] 0.0, 128
    %1450 = vxpose.xlu0.b32.cont [9/16] 0.0, 128
    %1451 = vxpose.xlu0.b32.cont [10/16] 0.0, 128
    %1452 = vxpose.xlu0.b32.cont [11/16] 0.0, 128
    %1453 = vxpose.xlu0.b32.cont [12/16] 0.0, 128
    %1454 = vxpose.xlu0.b32.cont [13/16] 0.0, 128
    %1455 = vxpose.xlu0.b32.cont [14/16] 0.0, 128
    %1456 = vxpose.xlu0.b32.cont [15/16] 0.0, 128
    %1457 = vxpose.xlu0.b32.end [16/16] 0.0, 128
    %v1458 = vpop.trf.xlu0
    %v1459 = vpop.trf.xlu0
    %v1460 = vpop.trf.xlu0
    %v1461 = vpop.trf.xlu0
    %v1462 = vpop.trf.xlu0
    %v1463 = vpop.trf.xlu0
    %v1464 = vpop.trf.xlu0
    %v1465 = vpop.trf.xlu0
    %v1466 = vpop.trf.xlu0
    %v1467 = vpop.trf.xlu0
    %v1468 = vpop.trf.xlu0
    %v1469 = vpop.trf.xlu0
    %v1470 = vpop.trf.xlu0
    %v1471 = vpop.trf.xlu0
    %v1472 = vpop.trf.xlu0
    %v1473 = vpop.trf.xlu0
    %vm1474 = vcmask 64512
    %v1476 = vsel %vm1474, %v1458, 0
    %v1479 = vsel %vm1474, %v1459, 0
    %v1482 = vsel %vm1474, %v1460, 0
    %v1485 = vsel %vm1474, %v1461, 0
    %1487 = vmatprep.subr.mxu0 %v1434
    %1488 = vmatpush1.msra.mxu0 %v1433
    %1489 = vmatprep.subr.mxu0 0.0
    %1490 = vmatpush1.msra.mxu0 0.0
    %1491 = vmatprep.subr.mxu0 0.0
    %1492 = vmatpush1.msra.mxu0 0.0
    %1493 = vmatprep.subr.mxu0 0.0
    %1494 = vmatpush1.msra.mxu0 0.0
    %1495 = vmatprep.subr.mxu0 0.0
    %1496 = vmatpush1.msra.mxu0 0.0
    %1497 = vmatprep.subr.mxu0 0.0
    %1498 = vmatpush1.msra.mxu0 0.0
    %1499 = vmatprep.subr.mxu0 0.0
    %1500 = vmatpush1.msra.mxu0 0.0
    %1501 = vmatprep.subr.mxu0 0.0
    %1502 = vmatpush1.msra.mxu0 0.0
    %1503 = vmatprep.subr.mxu0 0.0
    %1504 = vmatpush1.msra.mxu0 0.0
    %1505 = vmatprep.subr.mxu0 0.0
    %1506 = vmatpush1.msra.mxu0 0.0
    %1507 = vmatprep.subr.mxu0 0.0
    %1508 = vmatpush1.msra.mxu0 0.0
    %1509 = vmatprep.subr.mxu0 0.0
    %1510 = vmatpush1.msra.mxu0 0.0
    %1511 = vmatprep.subr.mxu0 0.0
    %1512 = vmatpush1.msra.mxu0 0.0
    %1513 = vmatprep.subr.mxu0 0.0
    %1514 = vmatpush1.msra.mxu0 0.0
    %1515 = vmatprep.subr.mxu0 0.0
    %1516 = vmatpush1.msra.mxu0 0.0
    %1517 = vmatprep.subr.mxu0 0.0
    %1518 = vmatpush1.msra.mxu0 0.0
    %1519 = vmatprep.subr.mxu0 0.0
    %1520 = vmatpush1.msra.mxu0 0.0
    %1521 = vmatprep.subr.mxu0 0.0
    %1522 = vmatpush1.msra.mxu0 0.0
    %1523 = vmatprep.subr.mxu0 0.0
    %1524 = vmatpush1.msra.mxu0 0.0
    %1525 = vmatprep.subr.mxu0 0.0
    %1526 = vmatpush1.msra.mxu0 0.0
    %1527 = vmatprep.subr.mxu0 0.0
    %1528 = vmatpush1.msra.mxu0 0.0
    %1529 = vmatprep.subr.mxu0 0.0
    %1530 = vmatpush1.msra.mxu0 0.0
    %1531 = vmatprep.subr.mxu0 0.0
    %1532 = vmatpush1.msra.mxu0 0.0
    %1533 = vmatprep.subr.mxu0 0.0
    %1534 = vmatpush1.msra.mxu0 0.0
    %1535 = vmatprep.subr.mxu0 0.0
    %1536 = vmatpush1.msra.mxu0 0.0
    %1537 = vmatprep.subr.mxu0 0.0
    %1538 = vmatpush1.msra.mxu0 0.0
    %1539 = vmatprep.subr.mxu0 0.0
    %1540 = vmatpush1.msra.mxu0 0.0
    %1541 = vmatprep.subr.mxu0 0.0
    %1542 = vmatpush1.msra.mxu0 0.0
    %1543 = vmatprep.subr.mxu0 0.0
    %1544 = vmatpush1.msra.mxu0 0.0
    %1545 = vmatprep.subr.mxu0 0.0
    %1546 = vmatpush1.msra.mxu0 0.0
    %1547 = vmatprep.subr.mxu0 0.0
    %1548 = vmatpush1.msra.mxu0 0.0
    %1549 = vmatprep.subr.mxu0 0.0
    %1550 = vmatpush1.msra.mxu0 0.0
    %1551 = vmatprep.mubr.f32.mxu0 0.0
    %1552 = vmatmul.mubr.f32.gmra.mrb[0].mxu0 %v1476
    %v1553 = vpop.f32.mrb[0].mxu0
    %v1554 = vadd.f32 0.0, %v1553
    %v1555 = vpop.f32.mrb[0].mxu0
    %v1556 = vadd.f32 0.0, %v1555
    %1557 = vmatprep.mubr.f32.mxu0 0.0
    %1558 = vmatmul.mubr.f32.gmra.mrb[0].mxu0 %v1479
    %v1559 = vpop.f32.mrb[0].mxu0
    %v1560 = vadd.f32 0.0, %v1559
    %v1561 = vpop.f32.mrb[0].mxu0
    %v1562 = vadd.f32 0.0, %v1561
    %1563 = vmatprep.mubr.f32.mxu0 0.0
    %1564 = vmatmul.mubr.f32.gmra.mrb[0].mxu0 %v1482
    %v1565 = vpop.f32.mrb[0].mxu0
    %v1566 = vadd.f32 0.0, %v1565
    %v1567 = vpop.f32.mrb[0].mxu0
    %v1568 = vadd.f32 0.0, %v1567
    %1569 = vmatprep.mubr.f32.mxu0 0.0
    %1570 = vmatmul.mubr.f32.gmra.mrb[0].mxu0 %v1485
    %v1571 = vpop.f32.mrb[0].mxu0
    %v1572 = vadd.f32 0.0, %v1571
    %v1573 = vpop.f32.mrb[0].mxu0
    %v1574 = vadd.f32 0.0, %v1573
    %1575 = vdwg.mxu0
    %1576 = vmatprep.subr.mxu0 %v1436
    %1577 = vmatpush1.msra.mxu0 %v1435
    %1578 = vmatprep.subr.mxu0 0.0
    %1579 = vmatpush1.msra.mxu0 0.0
    %1580 = vmatprep.subr.mxu0 0.0
    %1581 = vmatpush1.msra.mxu0 0.0
    %1582 = vmatprep.subr.mxu0 0.0
    %1583 = vmatpush1.msra.mxu0 0.0
    %1584 = vmatprep.subr.mxu0 0.0
    %1585 = vmatpush1.msra.mxu0 0.0
    %1586 = vmatprep.subr.mxu0 0.0
    %1587 = vmatpush1.msra.mxu0 0.0
    %1588 = vmatprep.subr.mxu0 0.0
    %1589 = vmatpush1.msra.mxu0 0.0
    %1590 = vmatprep.subr.mxu0 0.0
    %1591 = vmatpush1.msra.mxu0 0.0
    %1592 = vmatprep.subr.mxu0 0.0
    %1593 = vmatpush1.msra.mxu0 0.0
    %1594 = vmatprep.subr.mxu0 0.0
    %1595 = vmatpush1.msra.mxu0 0.0
    %1596 = vmatprep.subr.mxu0 0.0
    %1597 = vmatpush1.msra.mxu0 0.0
    %1598 = vmatprep.subr.mxu0 0.0
    %1599 = vmatpush1.msra.mxu0 0.0
    %1600 = vmatprep.subr.mxu0 0.0
    %1601 = vmatpush1.msra.mxu0 0.0
    %1602 = vmatprep.subr.mxu0 0.0
    %1603 = vmatpush1.msra.mxu0 0.0
    %1604 = vmatprep.subr.mxu0 0.0
    %1605 = vmatpush1.msra.mxu0 0.0
    %1606 = vmatprep.subr.mxu0 0.0
    %1607 = vmatpush1.msra.mxu0 0.0
    %1608 = vmatprep.subr.mxu0 0.0
    %1609 = vmatpush1.msra.mxu0 0.0
    %1610 = vmatprep.subr.mxu0 0.0
    %1611 = vmatpush1.msra.mxu0 0.0
    %1612 = vmatprep.subr.mxu0 0.0
    %1613 = vmatpush1.msra.mxu0 0.0
    %1614 = vmatprep.subr.mxu0 0.0
    %1615 = vmatpush1.msra.mxu0 0.0
    %1616 = vmatprep.subr.mxu0 0.0
    %1617 = vmatpush1.msra.mxu0 0.0
    %1618 = vmatprep.subr.mxu0 0.0
    %1619 = vmatpush1.msra.mxu0 0.0
    %1620 = vmatprep.subr.mxu0 0.0
    %1621 = vmatpush1.msra.mxu0 0.0
    %1622 = vmatprep.subr.mxu0 0.0
    %1623 = vmatpush1.msra.mxu0 0.0
    %1624 = vmatprep.subr.mxu0 0.0
    %1625 = vmatpush1.msra.mxu0 0.0
    %1626 = vmatprep.subr.mxu0 0.0
    %1627 = vmatpush1.msra.mxu0 0.0
    %1628 = vmatprep.subr.mxu0 0.0
    %1629 = vmatpush1.msra.mxu0 0.0
    %1630 = vmatprep.subr.mxu0 0.0
    %1631 = vmatpush1.msra.mxu0 0.0
    %1632 = vmatprep.subr.mxu0 0.0
    %1633 = vmatpush1.msra.mxu0 0.0
    %1634 = vmatprep.subr.mxu0 0.0
    %1635 = vmatpush1.msra.mxu0 0.0
    %1636 = vmatprep.subr.mxu0 0.0
    %1637 = vmatpush1.msra.mxu0 0.0
    %1638 = vmatprep.subr.mxu0 0.0
    %1639 = vmatpush1.msra.mxu0 0.0
    %1640 = vmatprep.mubr.f32.mxu0 0.0
    %1641 = vmatmul.mubr.f32.gmra.mrb[0].mxu0 %v1476
    %v1642 = vpop.f32.mrb[0].mxu0
    %v1643 = vadd.f32 0.0, %v1642
    %v1644 = vpop.f32.mrb[0].mxu0
    %v1645 = vadd.f32 0.0, %v1644
    %1646 = vmatprep.mubr.f32.mxu0 0.0
    %1647 = vmatmul.mubr.f32.gmra.mrb[0].mxu0 %v1479
    %v1648 = vpop.f32.mrb[0].mxu0
    %v1649 = vadd.f32 0.0, %v1648
    %v1650 = vpop.f32.mrb[0].mxu0
    %v1651 = vadd.f32 0.0, %v1650
    %1652 = vmatprep.mubr.f32.mxu0 0.0
    %1653 = vmatmul.mubr.f32.gmra.mrb[0].mxu0 %v1482
    %v1654 = vpop.f32.mrb[0].mxu0
    %v1655 = vadd.f32 0.0, %v1654
    %v1656 = vpop.f32.mrb[0].mxu0
    %v1657 = vadd.f32 0.0, %v1656
    %1658 = vmatprep.mubr.f32.mxu0 0.0
    %1659 = vmatmul.mubr.f32.gmra.mrb[0].mxu0 %v1485
    %v1660 = vpop.f32.mrb[0].mxu0
    %v1661 = vadd.f32 0.0, %v1660
    %v1662 = vpop.f32.mrb[0].mxu0
    %v1663 = vadd.f32 0.0, %v1662
    %1664 = vdwg.mxu0
    %1665 = vxpose.xlu0.b32.start [1/16] %v198, 128
    %1666 = vxpose.xlu0.b32.cont [2/16] 0.0, 128
    %1667 = vxpose.xlu0.b32.cont [3/16] 0.0, 128
    %1668 = vxpose.xlu0.b32.cont [4/16] 0.0, 128
    %1669 = vxpose.xlu0.b32.cont [5/16] 0.0, 128
    %1670 = vxpose.xlu0.b32.cont [6/16] 0.0, 128
    %1671 = vxpose.xlu0.b32.cont [7/16] 0.0, 128
    %1672 = vxpose.xlu0.b32.cont [8/16] 0.0, 128
    %1673 = vxpose.xlu0.b32.cont [9/16] 0.0, 128
    %1674 = vxpose.xlu0.b32.cont [10/16] 0.0, 128
    %1675 = vxpose.xlu0.b32.cont [11/16] 0.0, 128
    %1676 = vxpose.xlu0.b32.cont [12/16] 0.0, 128
    %1677 = vxpose.xlu0.b32.cont [13/16] 0.0, 128
    %1678 = vxpose.xlu0.b32.cont [14/16] 0.0, 128
    %1679 = vxpose.xlu0.b32.cont [15/16] 0.0, 128
    %1680 = vxpose.xlu0.b32.end [16/16] 0.0, 128
    %v1681 = vpop.trf.xlu0
    %v1682 = vpop.trf.xlu0
    %v1683 = vpop.trf.xlu0
    %v1684 = vpop.trf.xlu0
    %v1685 = vpop.trf.xlu0
    %v1686 = vpop.trf.xlu0
    %v1687 = vpop.trf.xlu0
    %v1688 = vpop.trf.xlu0
    %v1689 = vpop.trf.xlu0
    %v1690 = vpop.trf.xlu0
    %v1691 = vpop.trf.xlu0
    %v1692 = vpop.trf.xlu0
    %v1693 = vpop.trf.xlu0
    %v1694 = vpop.trf.xlu0
    %v1695 = vpop.trf.xlu0
    %v1696 = vpop.trf.xlu0
    %v1698 = vsel %vm1474, %v1681, 0
    %v1701 = vsel %vm1474, %v1682, 0
    %v1704 = vsel %vm1474, %v1683, 0
    %v1707 = vsel %vm1474, %v1684, 0
    %1709 = vmatprep.subr.mxu0 %v1439
    %1710 = vmatpush1.msra.mxu0 %v1438
    %1711 = vmatprep.subr.mxu0 0.0
    %1712 = vmatpush1.msra.mxu0 0.0
    %1713 = vmatprep.subr.mxu0 0.0
    %1714 = vmatpush1.msra.mxu0 0.0
    %1715 = vmatprep.subr.mxu0 0.0
    %1716 = vmatpush1.msra.mxu0 0.0
    %1717 = vmatprep.subr.mxu0 0.0
    %1718 = vmatpush1.msra.mxu0 0.0
    %1719 = vmatprep.subr.mxu0 0.0
    %1720 = vmatpush1.msra.mxu0 0.0
    %1721 = vmatprep.subr.mxu0 0.0
    %1722 = vmatpush1.msra.mxu0 0.0
    %1723 = vmatprep.subr.mxu0 0.0
    %1724 = vmatpush1.msra.mxu0 0.0
    %1725 = vmatprep.subr.mxu0 0.0
    %1726 = vmatpush1.msra.mxu0 0.0
    %1727 = vmatprep.subr.mxu0 0.0
    %1728 = vmatpush1.msra.mxu0 0.0
    %1729 = vmatprep.subr.mxu0 0.0
    %1730 = vmatpush1.msra.mxu0 0.0
    %1731 = vmatprep.subr.mxu0 0.0
    %1732 = vmatpush1.msra.mxu0 0.0
    %1733 = vmatprep.subr.mxu0 0.0
    %1734 = vmatpush1.msra.mxu0 0.0
    %1735 = vmatprep.subr.mxu0 0.0
    %1736 = vmatpush1.msra.mxu0 0.0
    %1737 = vmatprep.subr.mxu0 0.0
    %1738 = vmatpush1.msra.mxu0 0.0
    %1739 = vmatprep.subr.mxu0 0.0
    %1740 = vmatpush1.msra.mxu0 0.0
    %1741 = vmatprep.subr.mxu0 0.0
    %1742 = vmatpush1.msra.mxu0 0.0
    %1743 = vmatprep.subr.mxu0 0.0
    %1744 = vmatpush1.msra.mxu0 0.0
    %1745 = vmatprep.subr.mxu0 0.0
    %1746 = vmatpush1.msra.mxu0 0.0
    %1747 = vmatprep.subr.mxu0 0.0
    %1748 = vmatpush1.msra.mxu0 0.0
    %1749 = vmatprep.subr.mxu0 0.0
    %1750 = vmatpush1.msra.mxu0 0.0
    %1751 = vmatprep.subr.mxu0 0.0
    %1752 = vmatpush1.msra.mxu0 0.0
    %1753 = vmatprep.subr.mxu0 0.0
    %1754 = vmatpush1.msra.mxu0 0.0
    %1755 = vmatprep.subr.mxu0 0.0
    %1756 = vmatpush1.msra.mxu0 0.0
    %1757 = vmatprep.subr.mxu0 0.0
    %1758 = vmatpush1.msra.mxu0 0.0
    %1759 = vmatprep.subr.mxu0 0.0
    %1760 = vmatpush1.msra.mxu0 0.0
    %1761 = vmatprep.subr.mxu0 0.0
    %1762 = vmatpush1.msra.mxu0 0.0
    %1763 = vmatprep.subr.mxu0 0.0
    %1764 = vmatpush1.msra.mxu0 0.0
    %1765 = vmatprep.subr.mxu0 0.0
    %1766 = vmatpush1.msra.mxu0 0.0
    %1767 = vmatprep.subr.mxu0 0.0
    %1768 = vmatpush1.msra.mxu0 0.0
    %1769 = vmatprep.subr.mxu0 0.0
    %1770 = vmatpush1.msra.mxu0 0.0
    %1771 = vmatprep.subr.mxu0 0.0
    %1772 = vmatpush1.msra.mxu0 0.0
    %1773 = vmatprep.mubr.f32.mxu0 0.0
    %1774 = vmatmul.mubr.f32.gmra.mrb[0].mxu0 %v1698
    %v1775 = vpop.f32.mrb[0].mxu0
    %v1776 = vadd.f32 0.0, %v1775
    %v1777 = vpop.f32.mrb[0].mxu0
    %v1778 = vadd.f32 0.0, %v1777
    %1779 = vmatprep.mubr.f32.mxu0 0.0
    %1780 = vmatmul.mubr.f32.gmra.mrb[0].mxu0 %v1701
    %v1781 = vpop.f32.mrb[0].mxu0
    %v1782 = vadd.f32 0.0, %v1781
    %v1783 = vpop.f32.mrb[0].mxu0
    %v1784 = vadd.f32 0.0, %v1783
    %1785 = vmatprep.mubr.f32.mxu0 0.0
    %1786 = vmatmul.mubr.f32.gmra.mrb[0].mxu0 %v1704
    %v1787 = vpop.f32.mrb[0].mxu0
    %v1788 = vadd.f32 0.0, %v1787
    %v1789 = vpop.f32.mrb[0].mxu0
    %v1790 = vadd.f32 0.0, %v1789
    %1791 = vmatprep.mubr.f32.mxu0 0.0
    %1792 = vmatmul.mubr.f32.gmra.mrb[0].mxu0 %v1707
    %v1793 = vpop.f32.mrb[0].mxu0
    %v1794 = vadd.f32 0.0, %v1793
    %v1795 = vpop.f32.mrb[0].mxu0
    %v1796 = vadd.f32 0.0, %v1795
    %1797 = vdwg.mxu0
    %1798 = vmatprep.subr.mxu0 %v1441
    %1799 = vmatpush1.msra.mxu0 %v1440
    %1800 = vmatprep.subr.mxu0 0.0
    %1801 = vmatpush1.msra.mxu0 0.0
    %1802 = vmatprep.subr.mxu0 0.0
    %1803 = vmatpush1.msra.mxu0 0.0
    %1804 = vmatprep.subr.mxu0 0.0
    %1805 = vmatpush1.msra.mxu0 0.0
    %1806 = vmatprep.subr.mxu0 0.0
    %1807 = vmatpush1.msra.mxu0 0.0
    %1808 = vmatprep.subr.mxu0 0.0
    %1809 = vmatpush1.msra.mxu0 0.0
    %1810 = vmatprep.subr.mxu0 0.0
    %1811 = vmatpush1.msra.mxu0 0.0
    %1812 = vmatprep.subr.mxu0 0.0
    %1813 = vmatpush1.msra.mxu0 0.0
    %1814 = vmatprep.subr.mxu0 0.0
    %1815 = vmatpush1.msra.mxu0 0.0
    %1816 = vmatprep.subr.mxu0 0.0
    %1817 = vmatpush1.msra.mxu0 0.0
    %1818 = vmatprep.subr.mxu0 0.0
    %1819 = vmatpush1.msra.mxu0 0.0
    %1820 = vmatprep.subr.mxu0 0.0
    %1821 = vmatpush1.msra.mxu0 0.0
    %1822 = vmatprep.subr.mxu0 0.0
    %1823 = vmatpush1.msra.mxu0 0.0
    %1824 = vmatprep.subr.mxu0 0.0
    %1825 = vmatpush1.msra.mxu0 0.0
    %1826 = vmatprep.subr.mxu0 0.0
    %1827 = vmatpush1.msra.mxu0 0.0
    %1828 = vmatprep.subr.mxu0 0.0
    %1829 = vmatpush1.msra.mxu0 0.0
    %1830 = vmatprep.subr.mxu0 0.0
    %1831 = vmatpush1.msra.mxu0 0.0
    %1832 = vmatprep.subr.mxu0 0.0
    %1833 = vmatpush1.msra.mxu0 0.0
    %1834 = vmatprep.subr.mxu0 0.0
    %1835 = vmatpush1.msra.mxu0 0.0
    %1836 = vmatprep.subr.mxu0 0.0
    %1837 = vmatpush1.msra.mxu0 0.0
    %1838 = vmatprep.subr.mxu0 0.0
    %1839 = vmatpush1.msra.mxu0 0.0
    %1840 = vmatprep.subr.mxu0 0.0
    %1841 = vmatpush1.msra.mxu0 0.0
    %1842 = vmatprep.subr.mxu0 0.0
    %1843 = vmatpush1.msra.mxu0 0.0
    %1844 = vmatprep.subr.mxu0 0.0
    %1845 = vmatpush1.msra.mxu0 0.0
    %1846 = vmatprep.subr.mxu0 0.0
    %1847 = vmatpush1.msra.mxu0 0.0
    %1848 = vmatprep.subr.mxu0 0.0
    %1849 = vmatpush1.msra.mxu0 0.0
    %1850 = vmatprep.subr.mxu0 0.0
    %1851 = vmatpush1.msra.mxu0 0.0
    %1852 = vmatprep.subr.mxu0 0.0
    %1853 = vmatpush1.msra.mxu0 0.0
    %1854 = vmatprep.subr.mxu0 0.0
    %1855 = vmatpush1.msra.mxu0 0.0
    %1856 = vmatprep.subr.mxu0 0.0
    %1857 = vmatpush1.msra.mxu0 0.0
    %1858 = vmatprep.subr.mxu0 0.0
    %1859 = vmatpush1.msra.mxu0 0.0
    %1860 = vmatprep.subr.mxu0 0.0
    %1861 = vmatpush1.msra.mxu0 0.0
    %1862 = vmatprep.mubr.f32.mxu0 0.0
    %1863 = vmatmul.mubr.f32.gmra.mrb[0].mxu0 %v1698
    %v1864 = vpop.f32.mrb[0].mxu0
    %v1865 = vadd.f32 0.0, %v1864
    %v1866 = vpop.f32.mrb[0].mxu0
    %v1867 = vadd.f32 0.0, %v1866
    %1868 = vmatprep.mubr.f32.mxu0 0.0
    %1869 = vmatmul.mubr.f32.gmra.mrb[0].mxu0 %v1701
    %v1870 = vpop.f32.mrb[0].mxu0
    %v1871 = vadd.f32 0.0, %v1870
    %v1872 = vpop.f32.mrb[0].mxu0
    %v1873 = vadd.f32 0.0, %v1872
    %1874 = vmatprep.mubr.f32.mxu0 0.0
    %1875 = vmatmul.mubr.f32.gmra.mrb[0].mxu0 %v1704
    %v1876 = vpop.f32.mrb[0].mxu0
    %v1877 = vadd.f32 0.0, %v1876
    %v1878 = vpop.f32.mrb[0].mxu0
    %v1879 = vadd.f32 0.0, %v1878
    %1880 = vmatprep.mubr.f32.mxu0 0.0
    %1881 = vmatmul.mubr.f32.gmra.mrb[0].mxu0 %v1707
    %v1882 = vpop.f32.mrb[0].mxu0
    %v1883 = vadd.f32 0.0, %v1882
    %v1884 = vpop.f32.mrb[0].mxu0
    %v1885 = vadd.f32 0.0, %v1884
    %1886 = vdwg.mxu0
    %1887 = vst [vmem:[#allocation10] sm:$0xff] %v1554
    %1888 = vst [vmem:[#allocation10 + $0x8] sm:$0xff] %v1556
    %1889 = vst [vmem:[#allocation10 + $0x10] sm:$0xff] %v1643
    %1890 = vst [vmem:[#allocation10 + $0x18] sm:$0xff] %v1645
    %1891 = vst [vmem:[#allocation10 + $0x20] sm:$0xff] %v1560
    %1892 = vst [vmem:[#allocation10 + $0x28] sm:$0xff] %v1562
    %1893 = vst [vmem:[#allocation10 + $0x30] sm:$0xff] %v1649
    %1894 = vst [vmem:[#allocation10 + $0x38] sm:$0xff] %v1651
    %1895 = vst [vmem:[#allocation10 + $0x40] sm:$0xff] %v1566
    %1896 = vst [vmem:[#allocation10 + $0x48] sm:$0xff] %v1568
    %1897 = vst [vmem:[#allocation10 + $0x50] sm:$0xff] %v1655
    %1898 = vst [vmem:[#allocation10 + $0x58] sm:$0xff] %v1657
    %1899 = vst [vmem:[#allocation10 + $0x60] sm:$0xff] %v1572
    %1900 = vst [vmem:[#allocation10 + $0x68] sm:$0xff] %v1574
    %1901 = vst [vmem:[#allocation10 + $0x70] sm:$0xff] %v1661
    %1902 = vst [vmem:[#allocation10 + $0x78] sm:$0xff] %v1663
    %1903 = vst [vmem:[#allocation10 + $0x80] sm:$0xff] %v1776
    %1904 = vst [vmem:[#allocation10 + $0x88] sm:$0xff] %v1778
    %1905 = vst [vmem:[#allocation10 + $0x90] sm:$0xff] %v1865
    %1906 = vst [vmem:[#allocation10 + $0x98] sm:$0xff] %v1867
    %1907 = vst [vmem:[#allocation10 + $0xa0] sm:$0xff] %v1782
    %1908 = vst [vmem:[#allocation10 + $0xa8] sm:$0xff] %v1784
    %1909 = vst [vmem:[#allocation10 + $0xb0] sm:$0xff] %v1871
    %1910 = vst [vmem:[#allocation10 + $0xb8] sm:$0xff] %v1873
    %1911 = vst [vmem:[#allocation10 + $0xc0] sm:$0xff] %v1788
    %1912 = vst [vmem:[#allocation10 + $0xc8] sm:$0xff] %v1790
    %1913 = vst [vmem:[#allocation10 + $0xd0] sm:$0xff] %v1877
    %1914 = vst [vmem:[#allocation10 + $0xd8] sm:$0xff] %v1879
    %1915 = vst [vmem:[#allocation10 + $0xe0] sm:$0xff] %v1794
    %1916 = vst [vmem:[#allocation10 + $0xe8] sm:$0xff] %v1796
    %1917 = vst [vmem:[#allocation10 + $0xf0] sm:$0xff] %v1883
    %1918 = vst [vmem:[#allocation10 + $0xf8] sm:$0xff] %v1885
    // Predicated region
    $region46: #{tpu_custom_call.1} parent=1 // pred_check
      _
    $region47: #{tpu_custom_call.1} parent=1 // pred_check_branch
      %1920 = sbr.rel (0) target = $region49
    $region48: #{tpu_custom_call.1} parent=1 // pred_region
      %s1922 = ssub.s32 4096, 4096
      %1923 = vsyncadd [#allocation4], %s1922
      %s1924 = sshll.u32 [#allocation10], 4
      %s1925 = int_to_ptr.vmem [resolvable:$true] %s1924
      %1930 = dma.vmem_to_hbm [thread:$0]  %s1925, 4096, %s7, [#allocation4], 512, 512, 32
    $region49: #{tpu_custom_call.1} parent=1 // pred_fallthru
      _
    // Predicated region
    $region50: #{tpu_custom_call.1} parent=1 // pred_check
      _
    $region51: #{tpu_custom_call.1} parent=1 // pred_check_branch
      %1932 = sbr.rel (0) target = $region53
    $region52: #{tpu_custom_call.1} parent=1 // pred_region
      %1933 = dma.done [#allocation4], 4096
    $region53: #{tpu_custom_call.1} parent=1 // pred_fallthru
      _
    %1934 = vsyncpa [#allocation3], 1
    %1935 = vsyncpa [#allocation6], 1
    %1936 = vsyncpa [#allocation9], 1
    %1937 = vsyncpa [#allocation4], 1

</llo_original>
